<compile_context>
chip_gen: v7x
topology: tpu7x:2x2x1
jax: 0.10.0
libtpu: 0.0.40
codegen_flags: <defaults>
</compile_context>

<pallas_src>
import functools

import jax
import jax.numpy as jnp
from jax.experimental import pallas as pl
from jax.experimental.pallas import tpu as pltpu  # noqa: F401  (TPU backend)

IN_CHANNELS = 4
HIDDEN = 8            # hidden_channels
HEADS = 8
NUM_AGENTS = 5
NEG_SLOPE = 0.2
D = HEADS * HIDDEN    # 64  (per-layer output width, heads concatenated)
D1 = HIDDEN * 4       # 32  (critic_fc1 width)
NEG_BIG = -1e30


# ------------------------------ fused kernel ---------------------------------
def _gat_critic_kernel(x_ref, p1_ref, p2_ref, p3_ref, edge_ref, fc1_ref, fc2_ref,
                       out_ref, *, bd, d1b, fin1p):
    """Fully fused GATCritic forward; everything lane-packed over the B graphs.

      x_ref    : [A, B*Fin1]        node features, graph b in lanes [b*Fin1:(b+1)*Fin1]
      p*_ref   : [B*Fin + 1, 3*bd]  [ blockdiag(W) | blockdiag(W_src) | blockdiag(W_dst) ];
                                    last row (lanes 0:bd) = concat-head bias
      edge_ref : [5, A, A, bd]      0: mask (conv1, no self loops), 1: attr*k_edge (conv1),
                                    2: mask+self-loops,             3/4: attr_sl*k_edge (conv2/3)
      fc*_ref  : [K+1, N]           block-diagonal weight in rows 0:K, bias in row K
      out_ref  : [1, B]             lane-major state values
    """

    def gat_layer(x, proj_ref, fin_p, mask, eterm):
        w = proj_ref[0:fin_p, :]                                 # [fin_p, 3*bd]
        bias = proj_ref[fin_p:fin_p + 1, 0:bd]                   # [1, bd]
        # One fused MXU matmul for messages + both attention projections.
        z = jnp.dot(x, w, preferred_element_type=jnp.float32)    # [A, 3*bd]
        xw = z[:, 0:bd]                                          # messages (per head / graph)
        asrc = z[:, bd:2 * bd]                                   # <xw_h, att_src_h>, lane-replicated
        adst = z[:, 2 * bd:3 * bd]                               # <xw_h, att_dst_h>, lane-replicated

        # alpha[i, j, d] = a_dst[i,d] + a_src[j,d] + edge_attr[g(d), i, j] * k_edge[d]
        alpha = adst[:, None, :] + asrc[None, :, :] + eterm      # [A, A, bd]
        alpha = jnp.where(alpha > 0.0, alpha, NEG_SLOPE * alpha)  # LeakyReLU(0.2)
        logits = jnp.where(mask > 0.0, alpha, NEG_BIG)            # NaN-safe edge masking
        amax = jnp.max(logits, axis=1, keepdims=True)             # [A, 1, bd]
        amax = jnp.where(amax > 0.5 * NEG_BIG, amax, 0.0)         # isolated targets
        p = jnp.exp(logits - amax)                                # 0 on non-edges (underflow)
        denom = jnp.sum(p, axis=1)                                # [A, bd]
        agg = jnp.sum(p * xw[None, :, :], axis=1)                 # [A, bd]  (unnormalized)
        inv = pl.reciprocal(jnp.where(denom > 0.0, denom, 1.0), approx=False)
        # GATConv output (heads concatenated) + bias, then the module's relu.
        return jnp.maximum(agg * inv + bias, 0.0)                 # [A, bd]

    mask_raw = edge_ref[0]
    mask_sl = edge_ref[2]
    h = gat_layer(x_ref[...], p1_ref, fin1p, mask_raw, edge_ref[1])   # conv1 + relu
    h = gat_layer(h, p2_ref, bd, mask_sl, edge_ref[3])                # conv2 + relu
    h = gat_layer(h, p3_ref, bd, mask_sl, edge_ref[4])                # conv3 + relu

    # global_mean_pool (sublane mean) + critic MLP head (block-diagonal over graphs).
    pooled = jnp.mean(h, axis=0, keepdims=True)                       # [1, bd]
    hid = jnp.maximum(
        jnp.dot(pooled, fc1_ref[0:bd, :], preferred_element_type=jnp.float32)
        + fc1_ref[bd:bd + 1, :], 0.0)                                 # [1, B*D1]
    out_ref[...] = (jnp.dot(hid, fc2_ref[0:d1b, :], preferred_element_type=jnp.float32)
                    + fc2_ref[d1b:d1b + 1, :])                        # [1, B]


# ------------------------------- wrapper --------------------------------------
def gat_critic_forward(prepped, x, edge_mask, edge_attr):
    """x: [B, A, Fin]; edge_mask/edge_attr: [B, A, A] with row i = TARGET, col j = SOURCE."""
    B, A, f_in = x.shape
    bd = B * D
    x_packed = jnp.transpose(x, (1, 0, 2)).reshape(A, B * f_in)       # [A, B*Fin]

    # add_self_loops(fill_value='mean') for conv2/3: self-loop attr = mean of incoming attrs.
    eye = jnp.eye(A, dtype=jnp.float32)
    off_m = edge_mask * (1.0 - eye)
    off_e = edge_attr * off_m
    deg = jnp.sum(off_m, axis=2, keepdims=True)
    mean_in = jnp.sum(off_e, axis=2, keepdims=True) / jnp.maximum(deg, 1.0)
    mask_sl = off_m + eye
    attr_sl = off_e + eye * mean_in

    def lanes(t):   # [B, A, A] -> [A, A, B*D]  (lane d carries graph d // D)
        return jnp.repeat(jnp.transpose(t, (1, 2, 0)), D, axis=-1)

    edge_slab = jnp.stack([
        lanes(edge_mask),
        lanes(edge_attr) * prepped["k1"][None, None, :],
        lanes(mask_sl),
        lanes(attr_sl) * prepped["k2"][None, None, :],
        lanes(attr_sl) * prepped["k3"][None, None, :],
    ], axis=0)                                                        # [5, A, A, B*D]

    kernel = functools.partial(_gat_critic_kernel, bd=bd, d1b=B * D1, fin1p=B * f_in)
    out = pl.pallas_call(
        kernel,
        out_shape=jax.ShapeDtypeStruct((1, B), jnp.float32),          # lane-major head output
    )(x_packed, prepped["slab1"], prepped["slab2"], prepped["slab3"],
      edge_slab, prepped["fc1"], prepped["fc2"])
    return out.reshape(B, 1)


# ------------------------- parameter init / preprocessing ---------------------
def _glorot(key, shape, fan_in, fan_out):
    limit = (6.0 / (fan_in + fan_out)) ** 0.5
    return jax.random.uniform(key, shape, jnp.float32, -limit, limit)


def init_gat_conv(key, f_in, out_ch, heads):
    kw, ks, kd, ke, kew, kb = jax.random.split(key, 6)
    d = heads * out_ch
    return dict(
        w=_glorot(kw, (f_in, d), f_in, d),                    # lin (no bias)
        att_src=_glorot(ks, (heads, out_ch), out_ch, out_ch),
        att_dst=_glorot(kd, (heads, out_ch), out_ch, out_ch),
        att_edge=_glorot(ke, (heads, out_ch), out_ch, out_ch),
        w_edge=_glorot(kew, (d,), 1, d),                      # lin_edge (edge_dim=1, no bias)
        bias=0.1 * jax.random.normal(kb, (d,), jnp.float32),
    )


def _prep_conv_slab(p, heads, out_ch, num_graphs):
    """Fold per-head attention vectors into the node weights, block-diagonalize over graphs
    (lane packing), fuse [W | W_src | W_dst] along lanes and append the bias as the last row."""
    d = heads * out_ch
    group = jnp.arange(d) // out_ch
    same = (group[:, None] == group[None, :]).astype(jnp.float32)              # head-block mask
    w = p["w"]                                                                 # [f_in, d]
    w_src = w @ (same * p["att_src"].reshape(d)[:, None])                      # [f_in, d]
    w_dst = w @ (same * p["att_dst"].reshape(d)[:, None])                      # [f_in, d]
    k_head = jnp.sum(p["w_edge"].reshape(heads, out_ch) * p["att_edge"], axis=-1)   # [heads]
    k_packed = jnp.tile(jnp.repeat(k_head, out_ch), (num_graphs,))             # [B*d]
    eye_b = jnp.eye(num_graphs, dtype=jnp.float32)
    proj = jnp.concatenate(
        [jnp.kron(eye_b, w), jnp.kron(eye_b, w_src), jnp.kron(eye_b, w_dst)], axis=-1)
    bias_row = jnp.zeros((1, proj.shape[-1]), jnp.float32)
    bias_row = bias_row.at[0, :num_graphs * d].set(jnp.tile(p["bias"], (num_graphs,)))
    return jnp.concatenate([proj, bias_row], axis=0), k_packed                 # [B*f_in+1, 3*B*d]


def prepare_params(params_raw, num_graphs):
    conv1, conv2, conv3, fc1_w, fc1_b, fc2_w, fc2_b = params_raw
    slab1, k1 = _prep_conv_slab(conv1, HEADS, HIDDEN, num_graphs)
    slab2, k2 = _prep_conv_slab(conv2, HEADS, HIDDEN, num_graphs)
    slab3, k3 = _prep_conv_slab(conv3, HEADS, HIDDEN, num_graphs)
    eye_b = jnp.eye(num_graphs, dtype=jnp.float32)
    fc1_slab = jnp.concatenate(
        [jnp.kron(eye_b, fc1_w), jnp.tile(fc1_b, (num_graphs,))[None, :]], axis=0)   # [B*D+1, B*D1]
    fc2_slab = jnp.concatenate(
        [jnp.kron(eye_b, fc2_w), jnp.tile(fc2_b, (num_graphs,))[None, :]], axis=0)   # [B*D1+1, B]
    return dict(slab1=slab1, slab2=slab2, slab3=slab3, k1=k1, k2=k2, k3=k3,
                fc1=fc1_slab, fc2=fc2_slab)


# --------------------------- pure-JAX reference --------------------------------
def gat_critic_reference(params_raw, x, edge_mask, edge_attr):
    """Per-head dense reference (independent of the folded / lane-packed kernel math)."""
    conv1, conv2, conv3, fc1_w, fc1_b, fc2_w, fc2_b = params_raw
    B, A, _ = x.shape
    eye = jnp.eye(A, dtype=jnp.float32)

    def gat(p, h, mask, attr):
        xw_h = (h @ p["w"]).reshape(B, A, HEADS, HIDDEN)
        a_src = jnp.einsum("bjhc,hc->bjh", xw_h, p["att_src"])
        a_dst = jnp.einsum("bihc,hc->bih", xw_h, p["att_dst"])
        e_h = (attr[..., None] * p["w_edge"]).reshape(B, A, A, HEADS, HIDDEN)
        a_edge = jnp.einsum("bijhc,hc->bijh", e_h, p["att_edge"])
        alpha = a_dst[:, :, None, :] + a_src[:, None, :, :] + a_edge           # [B, i, j, H]
        alpha = jnp.where(alpha > 0, alpha, NEG_SLOPE * alpha)
        m = mask[..., None]
        logits = jnp.where(m > 0, alpha, -jnp.inf)
        amax = jnp.max(logits, axis=2, keepdims=True)
        amax = jnp.where(jnp.isfinite(amax), amax, 0.0)
        pr = jnp.exp(logits - amax) * m
        denom = jnp.sum(pr, axis=2, keepdims=True)
        attn = pr / jnp.where(denom > 0, denom, 1.0)
        out = jnp.einsum("bijh,bjhc->bihc", attn, xw_h).reshape(B, A, HEADS * HIDDEN)
        return out + p["bias"]

    off_m = edge_mask * (1.0 - eye)
    off_e = edge_attr * off_m
    deg = jnp.sum(off_m, axis=2, keepdims=True)
    mean_in = jnp.sum(off_e, axis=2, keepdims=True) / jnp.maximum(deg, 1.0)
    mask_sl, attr_sl = off_m + eye, off_e + eye * mean_in

    h = jax.nn.relu(gat(conv1, x, edge_mask, edge_attr))
    h = jax.nn.relu(gat(conv2, h, mask_sl, attr_sl))
    h = jax.nn.relu(gat(conv3, h, mask_sl, attr_sl))
    pooled = jnp.mean(h, axis=1)
    hid = jax.nn.relu(pooled @ fc1_w + fc1_b)
    return hid @ fc2_w + fc2_b                                                  # [B, 1]


# ---------------------------------- main ---------------------------------------
if __name__ == "__main__":
    key = jax.random.PRNGKey(0)
    (k_x, k_e, k_c1, k_c2, k_c3, k_f1w, k_f1b, k_f2w, k_f2b) = jax.random.split(key, 9)

    B, A = 2, NUM_AGENTS
    x = jax.random.normal(k_x, (B, A, IN_CHANNELS), jnp.float32)
    eye = jnp.eye(A, dtype=jnp.float32)[None]
    edge_mask = jnp.broadcast_to(1.0 - eye, (B, A, A))          # fully connected, no self loops
    edge_attr = jax.random.uniform(k_e, (B, A, A), jnp.float32) * edge_mask

    conv1 = init_gat_conv(k_c1, IN_CHANNELS, HIDDEN, HEADS)
    conv2 = init_gat_conv(k_c2, D, HIDDEN, HEADS)
    conv3 = init_gat_conv(k_c3, D, HIDDEN, HEADS)
    lim1 = (1.0 / D) ** 0.5
    fc1_w = jax.random.uniform(k_f1w, (D, D1), jnp.float32, -lim1, lim1)
    fc1_b = jax.random.uniform(k_f1b, (D1,), jnp.float32, -lim1, lim1)
    lim2 = (1.0 / D1) ** 0.5
    fc2_w = jax.random.uniform(k_f2w, (D1, 1), jnp.float32, -lim2, lim2)
    fc2_b = jax.random.uniform(k_f2b, (1,), jnp.float32, -lim2, lim2)

    params_raw = (conv1, conv2, conv3, fc1_w, fc1_b, fc2_w, fc2_b)
    prepped = prepare_params(params_raw, B)                     # host-side slab packing (one time)
    fwd = jax.jit(functools.partial(gat_critic_forward, prepped))

    out = fwd(x, edge_mask, edge_attr)
    jax.block_until_ready(out)
    assert out.shape == (B, 1) and out.dtype == jnp.float32
    assert bool(jnp.all(jnp.isfinite(out)))

    ref = gat_critic_reference(params_raw, x, edge_mask, edge_attr)
    assert bool(jnp.allclose(out, ref, rtol=2e-3, atol=2e-3)), (out, ref)
    print("KERNEL_OK")
</pallas_src>

<mosaic_0001>
module attributes {stable_mosaic.version = 11 : i64} {
  func.func @_gat_critic_kernel(%arg0: memref<5x8xf32, #tpu.memory_space<vmem>>, %arg1: memref<9x384xf32, #tpu.memory_space<vmem>>, %arg2: memref<129x384xf32, #tpu.memory_space<vmem>>, %arg3: memref<129x384xf32, #tpu.memory_space<vmem>>, %arg4: memref<5x5x5x128xf32, #tpu.memory_space<vmem>>, %arg5: memref<129x64xf32, #tpu.memory_space<vmem>>, %arg6: memref<65x2xf32, #tpu.memory_space<vmem>>, %arg7: memref<1x2xf32, #tpu.memory_space<vmem>>) attributes {dimension_semantics = [], scalar_prefetch = 0 : i64, scratch_operands = 0 : i64, tpu.core_type = #tpu.core_type<tc>} {
    %c0 = arith.constant 0 : index
    %c0_0 = arith.constant 0 : index
    %c0_1 = arith.constant 0 : index
    %c0_2 = arith.constant 0 : index
    %0 = vector.load %arg4[%c0, %c0_0, %c0_1, %c0_2] : memref<5x5x5x128xf32, #tpu.memory_space<vmem>>, vector<1x5x5x128xf32>
    %1 = vector.shape_cast %0 : vector<1x5x5x128xf32> to vector<5x5x128xf32>
    %c2 = arith.constant 2 : index
    %c0_3 = arith.constant 0 : index
    %c0_4 = arith.constant 0 : index
    %c0_5 = arith.constant 0 : index
    %2 = vector.load %arg4[%c2, %c0_3, %c0_4, %c0_5] : memref<5x5x5x128xf32, #tpu.memory_space<vmem>>, vector<1x5x5x128xf32>
    %3 = vector.shape_cast %2 : vector<1x5x5x128xf32> to vector<5x5x128xf32>
    %c0_6 = arith.constant 0 : index
    %c0_7 = arith.constant 0 : index
    %4 = vector.load %arg0[%c0_6, %c0_7] : memref<5x8xf32, #tpu.memory_space<vmem>>, vector<5x8xf32>
    %c1 = arith.constant 1 : index
    %c0_8 = arith.constant 0 : index
    %c0_9 = arith.constant 0 : index
    %c0_10 = arith.constant 0 : index
    %5 = vector.load %arg4[%c1, %c0_8, %c0_9, %c0_10] : memref<5x5x5x128xf32, #tpu.memory_space<vmem>>, vector<1x5x5x128xf32>
    %6 = vector.shape_cast %5 : vector<1x5x5x128xf32> to vector<5x5x128xf32>
    %c0_11 = arith.constant 0 : index
    %c0_12 = arith.constant 0 : index
    %7 = vector.load %arg1[%c0_11, %c0_12] : memref<9x384xf32, #tpu.memory_space<vmem>>, vector<8x384xf32>
    %c8 = arith.constant 8 : index
    %c0_13 = arith.constant 0 : index
    %8 = vector.load %arg1[%c8, %c0_13] : memref<9x384xf32, #tpu.memory_space<vmem>>, vector<1x128xf32>
    %cst = arith.constant dense<0.000000e+00> : vector<5x384xf32>
    %9 = tpu.matmul %4, %7, %cst {dimension_numbers = #tpu.dot_dimension_numbers<[1], [0], [0], [1], [0, 0, 1, 1], [], []>} : vector<5x8xf32>, vector<8x384xf32>, vector<5x384xf32> -> vector<5x384xf32>
    %10 = vector.extract_strided_slice %9 {offsets = [0, 0], sizes = [5, 128], strides = [1, 1]} : vector<5x384xf32> to vector<5x128xf32>
    %11 = vector.extract_strided_slice %9 {offsets = [0, 128], sizes = [5, 128], strides = [1, 1]} : vector<5x384xf32> to vector<5x128xf32>
    %12 = vector.extract_strided_slice %9 {offsets = [0, 256], sizes = [5, 128], strides = [1, 1]} : vector<5x384xf32> to vector<5x128xf32>
    %13 = vector.shape_cast %12 : vector<5x128xf32> to vector<5x1x128xf32>
    %14 = vector.shape_cast %11 : vector<5x128xf32> to vector<1x5x128xf32>
    %15 = vector.broadcast %13 : vector<5x1x128xf32> to vector<5x5x128xf32>
    %16 = vector.broadcast %14 : vector<1x5x128xf32> to vector<5x5x128xf32>
    %17 = arith.addf %15, %16 : vector<5x5x128xf32>
    %18 = arith.addf %17, %6 : vector<5x5x128xf32>
    %cst_14 = arith.constant 0.000000e+00 : f32
    %19 = vector.broadcast %cst_14 : f32 to vector<5x5x128xf32>
    %20 = arith.cmpf ogt, %18, %19 : vector<5x5x128xf32>
    %cst_15 = arith.constant 2.000000e-01 : f32
    %21 = vector.broadcast %cst_15 : f32 to vector<5x5x128xf32>
    %22 = arith.mulf %21, %18 : vector<5x5x128xf32>
    %23 = arith.select %20, %18, %22 : vector<5x5x128xi1>, vector<5x5x128xf32>
    %cst_16 = arith.constant 0.000000e+00 : f32
    %24 = vector.broadcast %cst_16 : f32 to vector<5x5x128xf32>
    %25 = arith.cmpf ogt, %1, %24 : vector<5x5x128xf32>
    %cst_17 = arith.constant -1.000000e+30 : f32
    %26 = vector.broadcast %cst_17 : f32 to vector<5x5x128xf32>
    %27 = arith.select %25, %23, %26 : vector<5x5x128xi1>, vector<5x5x128xf32>
    %cst_18 = arith.constant dense<0xFF800000> : vector<5x128xf32>
    %28 = vector.multi_reduction <maximumf>, %27, %cst_18 [1] : vector<5x5x128xf32> to vector<5x128xf32>
    %29 = vector.shape_cast %28 : vector<5x128xf32> to vector<5x1x128xf32>
    %cst_19 = arith.constant -5.000000e+29 : f32
    %30 = vector.broadcast %cst_19 : f32 to vector<5x1x128xf32>
    %31 = arith.cmpf ogt, %29, %30 : vector<5x1x128xf32>
    %cst_20 = arith.constant 0.000000e+00 : f32
    %32 = vector.broadcast %cst_20 : f32 to vector<5x1x128xf32>
    %33 = arith.select %31, %29, %32 : vector<5x1x128xi1>, vector<5x1x128xf32>
    %34 = vector.broadcast %33 : vector<5x1x128xf32> to vector<5x5x128xf32>
    %35 = arith.subf %27, %34 : vector<5x5x128xf32>
    %36 = math.exp %35 : vector<5x5x128xf32>
    %cst_21 = arith.constant dense<0.000000e+00> : vector<5x128xf32>
    %37 = vector.multi_reduction <add>, %36, %cst_21 [1] : vector<5x5x128xf32> to vector<5x128xf32>
    %38 = vector.shape_cast %10 : vector<5x128xf32> to vector<1x5x128xf32>
    %39 = vector.broadcast %38 : vector<1x5x128xf32> to vector<5x5x128xf32>
    %40 = arith.mulf %36, %39 : vector<5x5x128xf32>
    %cst_22 = arith.constant dense<0.000000e+00> : vector<5x128xf32>
    %41 = vector.multi_reduction <add>, %40, %cst_22 [1] : vector<5x5x128xf32> to vector<5x128xf32>
    %cst_23 = arith.constant 0.000000e+00 : f32
    %42 = vector.broadcast %cst_23 : f32 to vector<5x128xf32>
    %43 = arith.cmpf ogt, %37, %42 : vector<5x128xf32>
    %cst_24 = arith.constant 1.000000e+00 : f32
    %44 = vector.broadcast %cst_24 : f32 to vector<5x128xf32>
    %45 = arith.select %43, %37, %44 : vector<5x128xi1>, vector<5x128xf32>
    %46 = tpu.reciprocal %45 : vector<5x128xf32> -> vector<5x128xf32>
    %47 = arith.mulf %41, %46 : vector<5x128xf32>
    %48 = vector.broadcast %8 : vector<1x128xf32> to vector<5x128xf32>
    %49 = arith.addf %47, %48 : vector<5x128xf32>
    %cst_25 = arith.constant 0.000000e+00 : f32
    %50 = vector.broadcast %cst_25 : f32 to vector<5x128xf32>
    %51 = arith.maximumf %49, %50 : vector<5x128xf32>
    %c3 = arith.constant 3 : index
    %c0_26 = arith.constant 0 : index
    %c0_27 = arith.constant 0 : index
    %c0_28 = arith.constant 0 : index
    %52 = vector.load %arg4[%c3, %c0_26, %c0_27, %c0_28] : memref<5x5x5x128xf32, #tpu.memory_space<vmem>>, vector<1x5x5x128xf32>
    %53 = vector.shape_cast %52 : vector<1x5x5x128xf32> to vector<5x5x128xf32>
    %c0_29 = arith.constant 0 : index
    %c0_30 = arith.constant 0 : index
    %54 = vector.load %arg2[%c0_29, %c0_30] : memref<129x384xf32, #tpu.memory_space<vmem>>, vector<128x384xf32>
    %c128 = arith.constant 128 : index
    %c0_31 = arith.constant 0 : index
    %55 = vector.load %arg2[%c128, %c0_31] : memref<129x384xf32, #tpu.memory_space<vmem>>, vector<1x128xf32>
    %cst_32 = arith.constant dense<0.000000e+00> : vector<5x384xf32>
    %56 = tpu.matmul %51, %54, %cst_32 {dimension_numbers = #tpu.dot_dimension_numbers<[1], [0], [0], [1], [0, 0, 1, 1], [], []>} : vector<5x128xf32>, vector<128x384xf32>, vector<5x384xf32> -> vector<5x384xf32>
    %57 = vector.extract_strided_slice %56 {offsets = [0, 0], sizes = [5, 128], strides = [1, 1]} : vector<5x384xf32> to vector<5x128xf32>
    %58 = vector.extract_strided_slice %56 {offsets = [0, 128], sizes = [5, 128], strides = [1, 1]} : vector<5x384xf32> to vector<5x128xf32>
    %59 = vector.extract_strided_slice %56 {offsets = [0, 256], sizes = [5, 128], strides = [1, 1]} : vector<5x384xf32> to vector<5x128xf32>
    %60 = vector.shape_cast %59 : vector<5x128xf32> to vector<5x1x128xf32>
    %61 = vector.shape_cast %58 : vector<5x128xf32> to vector<1x5x128xf32>
    %62 = vector.broadcast %60 : vector<5x1x128xf32> to vector<5x5x128xf32>
    %63 = vector.broadcast %61 : vector<1x5x128xf32> to vector<5x5x128xf32>
    %64 = arith.addf %62, %63 : vector<5x5x128xf32>
    %65 = arith.addf %64, %53 : vector<5x5x128xf32>
    %cst_33 = arith.constant 0.000000e+00 : f32
    %66 = vector.broadcast %cst_33 : f32 to vector<5x5x128xf32>
    %67 = arith.cmpf ogt, %65, %66 : vector<5x5x128xf32>
    %cst_34 = arith.constant 2.000000e-01 : f32
    %68 = vector.broadcast %cst_34 : f32 to vector<5x5x128xf32>
    %69 = arith.mulf %68, %65 : vector<5x5x128xf32>
    %70 = arith.select %67, %65, %69 : vector<5x5x128xi1>, vector<5x5x128xf32>
    %cst_35 = arith.constant 0.000000e+00 : f32
    %71 = vector.broadcast %cst_35 : f32 to vector<5x5x128xf32>
    %72 = arith.cmpf ogt, %3, %71 : vector<5x5x128xf32>
    %cst_36 = arith.constant -1.000000e+30 : f32
    %73 = vector.broadcast %cst_36 : f32 to vector<5x5x128xf32>
    %74 = arith.select %72, %70, %73 : vector<5x5x128xi1>, vector<5x5x128xf32>
    %cst_37 = arith.constant dense<0xFF800000> : vector<5x128xf32>
    %75 = vector.multi_reduction <maximumf>, %74, %cst_37 [1] : vector<5x5x128xf32> to vector<5x128xf32>
    %76 = vector.shape_cast %75 : vector<5x128xf32> to vector<5x1x128xf32>
    %cst_38 = arith.constant -5.000000e+29 : f32
    %77 = vector.broadcast %cst_38 : f32 to vector<5x1x128xf32>
    %78 = arith.cmpf ogt, %76, %77 : vector<5x1x128xf32>
    %cst_39 = arith.constant 0.000000e+00 : f32
    %79 = vector.broadcast %cst_39 : f32 to vector<5x1x128xf32>
    %80 = arith.select %78, %76, %79 : vector<5x1x128xi1>, vector<5x1x128xf32>
    %81 = vector.broadcast %80 : vector<5x1x128xf32> to vector<5x5x128xf32>
    %82 = arith.subf %74, %81 : vector<5x5x128xf32>
    %83 = math.exp %82 : vector<5x5x128xf32>
    %cst_40 = arith.constant dense<0.000000e+00> : vector<5x128xf32>
    %84 = vector.multi_reduction <add>, %83, %cst_40 [1] : vector<5x5x128xf32> to vector<5x128xf32>
    %85 = vector.shape_cast %57 : vector<5x128xf32> to vector<1x5x128xf32>
    %86 = vector.broadcast %85 : vector<1x5x128xf32> to vector<5x5x128xf32>
    %87 = arith.mulf %83, %86 : vector<5x5x128xf32>
    %cst_41 = arith.constant dense<0.000000e+00> : vector<5x128xf32>
    %88 = vector.multi_reduction <add>, %87, %cst_41 [1] : vector<5x5x128xf32> to vector<5x128xf32>
    %cst_42 = arith.constant 0.000000e+00 : f32
    %89 = vector.broadcast %cst_42 : f32 to vector<5x128xf32>
    %90 = arith.cmpf ogt, %84, %89 : vector<5x128xf32>
    %cst_43 = arith.constant 1.000000e+00 : f32
    %91 = vector.broadcast %cst_43 : f32 to vector<5x128xf32>
    %92 = arith.select %90, %84, %91 : vector<5x128xi1>, vector<5x128xf32>
    %93 = tpu.reciprocal %92 : vector<5x128xf32> -> vector<5x128xf32>
    %94 = arith.mulf %88, %93 : vector<5x128xf32>
    %95 = vector.broadcast %55 : vector<1x128xf32> to vector<5x128xf32>
    %96 = arith.addf %94, %95 : vector<5x128xf32>
    %cst_44 = arith.constant 0.000000e+00 : f32
    %97 = vector.broadcast %cst_44 : f32 to vector<5x128xf32>
    %98 = arith.maximumf %96, %97 : vector<5x128xf32>
    %c4 = arith.constant 4 : index
    %c0_45 = arith.constant 0 : index
    %c0_46 = arith.constant 0 : index
    %c0_47 = arith.constant 0 : index
    %99 = vector.load %arg4[%c4, %c0_45, %c0_46, %c0_47] : memref<5x5x5x128xf32, #tpu.memory_space<vmem>>, vector<1x5x5x128xf32>
    %100 = vector.shape_cast %99 : vector<1x5x5x128xf32> to vector<5x5x128xf32>
    %c0_48 = arith.constant 0 : index
    %c0_49 = arith.constant 0 : index
    %101 = vector.load %arg3[%c0_48, %c0_49] : memref<129x384xf32, #tpu.memory_space<vmem>>, vector<128x384xf32>
    %c128_50 = arith.constant 128 : index
    %c0_51 = arith.constant 0 : index
    %102 = vector.load %arg3[%c128_50, %c0_51] : memref<129x384xf32, #tpu.memory_space<vmem>>, vector<1x128xf32>
    %cst_52 = arith.constant dense<0.000000e+00> : vector<5x384xf32>
    %103 = tpu.matmul %98, %101, %cst_52 {dimension_numbers = #tpu.dot_dimension_numbers<[1], [0], [0], [1], [0, 0, 1, 1], [], []>} : vector<5x128xf32>, vector<128x384xf32>, vector<5x384xf32> -> vector<5x384xf32>
    %104 = vector.extract_strided_slice %103 {offsets = [0, 0], sizes = [5, 128], strides = [1, 1]} : vector<5x384xf32> to vector<5x128xf32>
    %105 = vector.extract_strided_slice %103 {offsets = [0, 128], sizes = [5, 128], strides = [1, 1]} : vector<5x384xf32> to vector<5x128xf32>
    %106 = vector.extract_strided_slice %103 {offsets = [0, 256], sizes = [5, 128], strides = [1, 1]} : vector<5x384xf32> to vector<5x128xf32>
    %107 = vector.shape_cast %106 : vector<5x128xf32> to vector<5x1x128xf32>
    %108 = vector.shape_cast %105 : vector<5x128xf32> to vector<1x5x128xf32>
    %109 = vector.broadcast %107 : vector<5x1x128xf32> to vector<5x5x128xf32>
    %110 = vector.broadcast %108 : vector<1x5x128xf32> to vector<5x5x128xf32>
    %111 = arith.addf %109, %110 : vector<5x5x128xf32>
    %112 = arith.addf %111, %100 : vector<5x5x128xf32>
    %cst_53 = arith.constant 0.000000e+00 : f32
    %113 = vector.broadcast %cst_53 : f32 to vector<5x5x128xf32>
    %114 = arith.cmpf ogt, %112, %113 : vector<5x5x128xf32>
    %cst_54 = arith.constant 2.000000e-01 : f32
    %115 = vector.broadcast %cst_54 : f32 to vector<5x5x128xf32>
    %116 = arith.mulf %115, %112 : vector<5x5x128xf32>
    %117 = arith.select %114, %112, %116 : vector<5x5x128xi1>, vector<5x5x128xf32>
    %cst_55 = arith.constant 0.000000e+00 : f32
    %118 = vector.broadcast %cst_55 : f32 to vector<5x5x128xf32>
    %119 = arith.cmpf ogt, %3, %118 : vector<5x5x128xf32>
    %cst_56 = arith.constant -1.000000e+30 : f32
    %120 = vector.broadcast %cst_56 : f32 to vector<5x5x128xf32>
    %121 = arith.select %119, %117, %120 : vector<5x5x128xi1>, vector<5x5x128xf32>
    %cst_57 = arith.constant dense<0xFF800000> : vector<5x128xf32>
    %122 = vector.multi_reduction <maximumf>, %121, %cst_57 [1] : vector<5x5x128xf32> to vector<5x128xf32>
    %123 = vector.shape_cast %122 : vector<5x128xf32> to vector<5x1x128xf32>
    %cst_58 = arith.constant -5.000000e+29 : f32
    %124 = vector.broadcast %cst_58 : f32 to vector<5x1x128xf32>
    %125 = arith.cmpf ogt, %123, %124 : vector<5x1x128xf32>
    %cst_59 = arith.constant 0.000000e+00 : f32
    %126 = vector.broadcast %cst_59 : f32 to vector<5x1x128xf32>
    %127 = arith.select %125, %123, %126 : vector<5x1x128xi1>, vector<5x1x128xf32>
    %128 = vector.broadcast %127 : vector<5x1x128xf32> to vector<5x5x128xf32>
    %129 = arith.subf %121, %128 : vector<5x5x128xf32>
    %130 = math.exp %129 : vector<5x5x128xf32>
    %cst_60 = arith.constant dense<0.000000e+00> : vector<5x128xf32>
    %131 = vector.multi_reduction <add>, %130, %cst_60 [1] : vector<5x5x128xf32> to vector<5x128xf32>
    %132 = vector.shape_cast %104 : vector<5x128xf32> to vector<1x5x128xf32>
    %133 = vector.broadcast %132 : vector<1x5x128xf32> to vector<5x5x128xf32>
    %134 = arith.mulf %130, %133 : vector<5x5x128xf32>
    %cst_61 = arith.constant dense<0.000000e+00> : vector<5x128xf32>
    %135 = vector.multi_reduction <add>, %134, %cst_61 [1] : vector<5x5x128xf32> to vector<5x128xf32>
    %cst_62 = arith.constant 0.000000e+00 : f32
    %136 = vector.broadcast %cst_62 : f32 to vector<5x128xf32>
    %137 = arith.cmpf ogt, %131, %136 : vector<5x128xf32>
    %cst_63 = arith.constant 1.000000e+00 : f32
    %138 = vector.broadcast %cst_63 : f32 to vector<5x128xf32>
    %139 = arith.select %137, %131, %138 : vector<5x128xi1>, vector<5x128xf32>
    %140 = tpu.reciprocal %139 : vector<5x128xf32> -> vector<5x128xf32>
    %141 = arith.mulf %135, %140 : vector<5x128xf32>
    %142 = vector.broadcast %102 : vector<1x128xf32> to vector<5x128xf32>
    %143 = arith.addf %141, %142 : vector<5x128xf32>
    %cst_64 = arith.constant 0.000000e+00 : f32
    %144 = vector.broadcast %cst_64 : f32 to vector<5x128xf32>
    %145 = arith.maximumf %143, %144 : vector<5x128xf32>
    %cst_65 = arith.constant dense<0.000000e+00> : vector<128xf32>
    %146 = vector.multi_reduction <add>, %145, %cst_65 [0] : vector<5x128xf32> to vector<128xf32>
    %147 = vector.shape_cast %146 : vector<128xf32> to vector<1x128xf32>
    %cst_66 = arith.constant 5.000000e+00 : f32
    %148 = vector.broadcast %cst_66 : f32 to vector<1x128xf32>
    %149 = arith.divf %147, %148 : vector<1x128xf32>
    %c0_67 = arith.constant 0 : index
    %c0_68 = arith.constant 0 : index
    %150 = vector.load %arg5[%c0_67, %c0_68] : memref<129x64xf32, #tpu.memory_space<vmem>>, vector<128x64xf32>
    %cst_69 = arith.constant dense<0.000000e+00> : vector<1x64xf32>
    %151 = tpu.matmul %149, %150, %cst_69 {dimension_numbers = #tpu.dot_dimension_numbers<[1], [0], [0], [1], [0, 0, 1, 1], [], []>} : vector<1x128xf32>, vector<128x64xf32>, vector<1x64xf32> -> vector<1x64xf32>
    %c128_70 = arith.constant 128 : index
    %c0_71 = arith.constant 0 : index
    %152 = vector.load %arg5[%c128_70, %c0_71] : memref<129x64xf32, #tpu.memory_space<vmem>>, vector<1x64xf32>
    %153 = arith.addf %151, %152 : vector<1x64xf32>
    %cst_72 = arith.constant 0.000000e+00 : f32
    %154 = vector.broadcast %cst_72 : f32 to vector<1x64xf32>
    %155 = arith.maximumf %153, %154 : vector<1x64xf32>
    %c0_73 = arith.constant 0 : index
    %c0_74 = arith.constant 0 : index
    %156 = vector.load %arg6[%c0_73, %c0_74] : memref<65x2xf32, #tpu.memory_space<vmem>>, vector<64x2xf32>
    %cst_75 = arith.constant dense<0.000000e+00> : vector<1x2xf32>
    %157 = tpu.matmul %155, %156, %cst_75 {dimension_numbers = #tpu.dot_dimension_numbers<[1], [0], [0], [1], [0, 0, 1, 1], [], []>} : vector<1x64xf32>, vector<64x2xf32>, vector<1x2xf32> -> vector<1x2xf32>
    %c64 = arith.constant 64 : index
    %c0_76 = arith.constant 0 : index
    %158 = vector.load %arg6[%c64, %c0_76] : memref<65x2xf32, #tpu.memory_space<vmem>>, vector<1x2xf32>
    %159 = arith.addf %157, %158 : vector<1x2xf32>
    %c0_77 = arith.constant 0 : index
    %c0_78 = arith.constant 0 : index
    %160 = vector.load %arg7[%c0_77, %c0_78] : memref<1x2xf32, #tpu.memory_space<vmem>>, vector<1x2xf32>
    tpu.vector_store %arg7[%c0_77, %c0_78], %159 {strides = array<i32>} : memref<1x2xf32, #tpu.memory_space<vmem>>, vector<1x2xf32>,
    return
  }
}

</mosaic_0001>

<llo_original>
// kernel: gat_critic_forward.1
$region0: #{gat_critic_forward.1}
  #allocation0 [shape = 'u32[]', space=smem, size = 0x4, offset = 0x4, fixed_abs, tag = 'smem constant byte address 0x4 - core index']
  #allocation1 [shape = 'u32[144,128]{1,0:T(1,128)}', space=vmem, size = 0x12000, scoped, tag = 'internal scratch']
  %s0 = inlined_call_operand.vmem [shape: f32[5,8], index: 0, kind: input, shape index: {}]
  %s1 = inlined_call_operand.vmem [shape: f32[9,384], index: 1, kind: input, shape index: {}]
  %s2 = inlined_call_operand.vmem [shape: f32[129,384], index: 2, kind: input, shape index: {}]
  %s3 = inlined_call_operand.vmem [shape: f32[129,384], index: 3, kind: input, shape index: {}]
  %s4 = inlined_call_operand.vmem [shape: f32[5,5,5,128], index: 4, kind: input, shape index: {}]
  %s5 = inlined_call_operand.vmem [shape: f32[129,64], index: 5, kind: input, shape index: {}]
  %s6 = inlined_call_operand.vmem [shape: f32[65,2], index: 6, kind: input, shape index: {}]
  %s7 = inlined_call_operand.hbm [shape: f32[1,2], index: 7, kind: output, shape index: {}]
  %s8 = sld [smem:[#allocation0]]
  $region38: #{gat_critic_forward.1} parent=0
    _
  %s10 = ssub.s32 1, %s8
  %s11 = scalar_select 0, %s10, %s8
  $region1: #{gat_critic_forward.1} parent=0
    #allocation2 [shape = 'u8[512]{0}', space=vmem, size = 0x400, scoped, tag = 'output window, operand 0, single buffered']
    #allocation3 [shape = 's32[1]{0}', space=sflag, size = 0x4, scoped, tag = 'scoped memory for gat_critic_forward.1']
    %12 = vsyncpa [#allocation3], 0
    // Predicated region
    $region2: #{gat_critic_forward.1} parent=1 // pred_check
      _
    $region3: #{gat_critic_forward.1} parent=1 // pred_check_branch
      %14 = sbr.rel (0) target = $region5
    $region4: #{gat_critic_forward.1} parent=1 // pred_region
      _
    $region5: #{gat_critic_forward.1} parent=1 // pred_fallthru
      _
    // Predicated region
    $region6: #{gat_critic_forward.1} parent=1 // pred_check
      _
    $region7: #{gat_critic_forward.1} parent=1 // pred_check_branch
      %16 = sbr.rel (0) target = $region9
    $region8: #{gat_critic_forward.1} parent=1 // pred_region
      _
    $region9: #{gat_critic_forward.1} parent=1 // pred_fallthru
      _
    // Predicated region
    $region10: #{gat_critic_forward.1} parent=1 // pred_check
      _
    $region11: #{gat_critic_forward.1} parent=1 // pred_check_branch
      %18 = sbr.rel (0) target = $region13
    $region12: #{gat_critic_forward.1} parent=1 // pred_region
      _
    $region13: #{gat_critic_forward.1} parent=1 // pred_fallthru
      _
    // Predicated region
    $region14: #{gat_critic_forward.1} parent=1 // pred_check
      _
    $region15: #{gat_critic_forward.1} parent=1 // pred_check_branch
      %20 = sbr.rel (0) target = $region17
    $region16: #{gat_critic_forward.1} parent=1 // pred_region
      _
    $region17: #{gat_critic_forward.1} parent=1 // pred_fallthru
      _
    // Predicated region
    $region18: #{gat_critic_forward.1} parent=1 // pred_check
      _
    $region19: #{gat_critic_forward.1} parent=1 // pred_check_branch
      %22 = sbr.rel (0) target = $region21
    $region20: #{gat_critic_forward.1} parent=1 // pred_region
      _
    $region21: #{gat_critic_forward.1} parent=1 // pred_fallthru
      _
    // Predicated region
    $region22: #{gat_critic_forward.1} parent=1 // pred_check
      _
    $region23: #{gat_critic_forward.1} parent=1 // pred_check_branch
      %24 = sbr.rel (0) target = $region25
    $region24: #{gat_critic_forward.1} parent=1 // pred_region
      _
    $region25: #{gat_critic_forward.1} parent=1 // pred_fallthru
      _
    // Predicated region
    $region26: #{gat_critic_forward.1} parent=1 // pred_check
      _
    $region27: #{gat_critic_forward.1} parent=1 // pred_check_branch
      %26 = sbr.rel (0) target = $region29
    $region28: #{gat_critic_forward.1} parent=1 // pred_region
      _
    $region29: #{gat_critic_forward.1} parent=1 // pred_fallthru
      _
    %v27 = vld [vmem:[%s4] sm:$0x1f]
    %v28 = vld [vmem:[%s4 + $0x8] sm:$0x1f]
    %v29 = vld [vmem:[%s4 + $0x10] sm:$0x1f]
    %v30 = vld [vmem:[%s4 + $0x18] sm:$0x1f]
    %v31 = vld [vmem:[%s4 + $0x20] sm:$0x1f]
    %s32 = scalar_lea.vmem %s4, 80
    %v33 = vld [vmem:[%s32] sm:$0x1f]
    %v34 = vld [vmem:[%s32 + $0x8] sm:$0x1f]
    %v35 = vld [vmem:[%s32 + $0x10] sm:$0x1f]
    %v36 = vld [vmem:[%s32 + $0x18] sm:$0x1f]
    %v37 = vld [vmem:[%s32 + $0x20] sm:$0x1f]
    %v38 = vld [vmem:[%s0] sm:$0x1f]
    %s39 = scalar_lea.vmem %s4, 40
    %v40 = vld [vmem:[%s39] sm:$0x1f]
    %v41 = vld [vmem:[%s39 + $0x8] sm:$0x1f]
    %v42 = vld [vmem:[%s39 + $0x10] sm:$0x1f]
    %v43 = vld [vmem:[%s39 + $0x18] sm:$0x1f]
    %v44 = vld [vmem:[%s39 + $0x20] sm:$0x1f]
    %v45 = vld [vmem:[%s1] sm:$0xff]
    %v46 = vld [vmem:[%s1 + $0x8] sm:$0xff]
    %v47 = vld [vmem:[%s1 + $0x10] sm:$0xff]
    %v48 = vld [vmem:[%s1 + $0x18] ss:$0 sm:$0xff]
    %vm49 = vcmask 64512
    %v51 = vsel %vm49, %v38, 0
    %53 = vmatprep.subr.mxu0 %v46
    %54 = vmatpush1.msra.mxu0 %v45
    %55 = vmatprep.subr.mxu0 0.0
    %56 = vmatpush1.msra.mxu0 0.0
    %57 = vmatprep.subr.mxu0 0.0
    %58 = vmatpush1.msra.mxu0 0.0
    %59 = vmatprep.subr.mxu0 0.0
    %60 = vmatpush1.msra.mxu0 0.0
    %61 = vmatprep.subr.mxu0 0.0
    %62 = vmatpush1.msra.mxu0 0.0
    %63 = vmatprep.subr.mxu0 0.0
    %64 = vmatpush1.msra.mxu0 0.0
    %65 = vmatprep.subr.mxu0 0.0
    %66 = vmatpush1.msra.mxu0 0.0
    %67 = vmatprep.subr.mxu0 0.0
    %68 = vmatpush1.msra.mxu0 0.0
    %69 = vmatprep.subr.mxu0 0.0
    %70 = vmatpush1.msra.mxu0 0.0
    %71 = vmatprep.subr.mxu0 0.0
    %72 = vmatpush1.msra.mxu0 0.0
    %73 = vmatprep.subr.mxu0 0.0
    %74 = vmatpush1.msra.mxu0 0.0
    %75 = vmatprep.subr.mxu0 0.0
    %76 = vmatpush1.msra.mxu0 0.0
    %77 = vmatprep.subr.mxu0 0.0
    %78 = vmatpush1.msra.mxu0 0.0
    %79 = vmatprep.subr.mxu0 0.0
    %80 = vmatpush1.msra.mxu0 0.0
    %81 = vmatprep.subr.mxu0 0.0
    %82 = vmatpush1.msra.mxu0 0.0
    %83 = vmatprep.subr.mxu0 0.0
    %84 = vmatpush1.msra.mxu0 0.0
    %85 = vmatprep.subr.mxu0 0.0
    %86 = vmatpush1.msra.mxu0 0.0
    %87 = vmatprep.subr.mxu0 0.0
    %88 = vmatpush1.msra.mxu0 0.0
    %89 = vmatprep.subr.mxu0 0.0
    %90 = vmatpush1.msra.mxu0 0.0
    %91 = vmatprep.subr.mxu0 0.0
    %92 = vmatpush1.msra.mxu0 0.0
    %93 = vmatprep.subr.mxu0 0.0
    %94 = vmatpush1.msra.mxu0 0.0
    %95 = vmatprep.subr.mxu0 0.0
    %96 = vmatpush1.msra.mxu0 0.0
    %97 = vmatprep.subr.mxu0 0.0
    %98 = vmatpush1.msra.mxu0 0.0
    %99 = vmatprep.subr.mxu0 0.0
    %100 = vmatpush1.msra.mxu0 0.0
    %101 = vmatprep.subr.mxu0 0.0
    %102 = vmatpush1.msra.mxu0 0.0
    %103 = vmatprep.subr.mxu0 0.0
    %104 = vmatpush1.msra.mxu0 0.0
    %105 = vmatprep.subr.mxu0 0.0
    %106 = vmatpush1.msra.mxu0 0.0
    %107 = vmatprep.subr.mxu0 0.0
    %108 = vmatpush1.msra.mxu0 0.0
    %109 = vmatprep.subr.mxu0 0.0
    %110 = vmatpush1.msra.mxu0 0.0
    %111 = vmatprep.subr.mxu0 0.0
    %112 = vmatpush1.msra.mxu0 0.0
    %113 = vmatprep.subr.mxu0 0.0
    %114 = vmatpush1.msra.mxu0 0.0
    %115 = vmatprep.subr.mxu0 0.0
    %116 = vmatpush1.msra.mxu0 0.0
    %117 = vmatprep.mubr.f32.mxu0 0.0
    %118 = vmatmul.mubr.f32.gmra.mrb[0].mxu0 %v51
    %v119 = vpop.f32.mrb[0].mxu0
    %v120 = vadd.f32 0.0, %v119
    %v121 = vpop.f32.mrb[0].mxu0
    %v122 = vadd.f32 0.0, %v121
    %123 = vdwg.mxu0
    %124 = vmatprep.subr.mxu0 0.0
    %125 = vmatpush1.msra.mxu0 %v47
    %126 = vmatprep.subr.mxu0 0.0
    %127 = vmatpush1.msra.mxu0 0.0
    %128 = vmatprep.subr.mxu0 0.0
    %129 = vmatpush1.msra.mxu0 0.0
    %130 = vmatprep.subr.mxu0 0.0
    %131 = vmatpush1.msra.mxu0 0.0
    %132 = vmatprep.subr.mxu0 0.0
    %133 = vmatpush1.msra.mxu0 0.0
    %134 = vmatprep.subr.mxu0 0.0
    %135 = vmatpush1.msra.mxu0 0.0
    %136 = vmatprep.subr.mxu0 0.0
    %137 = vmatpush1.msra.mxu0 0.0
    %138 = vmatprep.subr.mxu0 0.0
    %139 = vmatpush1.msra.mxu0 0.0
    %140 = vmatprep.subr.mxu0 0.0
    %141 = vmatpush1.msra.mxu0 0.0
    %142 = vmatprep.subr.mxu0 0.0
    %143 = vmatpush1.msra.mxu0 0.0
    %144 = vmatprep.subr.mxu0 0.0
    %145 = vmatpush1.msra.mxu0 0.0
    %146 = vmatprep.subr.mxu0 0.0
    %147 = vmatpush1.msra.mxu0 0.0
    %148 = vmatprep.subr.mxu0 0.0
    %149 = vmatpush1.msra.mxu0 0.0
    %150 = vmatprep.subr.mxu0 0.0
    %151 = vmatpush1.msra.mxu0 0.0
    %152 = vmatprep.subr.mxu0 0.0
    %153 = vmatpush1.msra.mxu0 0.0
    %154 = vmatprep.subr.mxu0 0.0
    %155 = vmatpush1.msra.mxu0 0.0
    %156 = vmatprep.subr.mxu0 0.0
    %157 = vmatpush1.msra.mxu0 0.0
    %158 = vmatprep.subr.mxu0 0.0
    %159 = vmatpush1.msra.mxu0 0.0
    %160 = vmatprep.subr.mxu0 0.0
    %161 = vmatpush1.msra.mxu0 0.0
    %162 = vmatprep.subr.mxu0 0.0
    %163 = vmatpush1.msra.mxu0 0.0
    %164 = vmatprep.subr.mxu0 0.0
    %165 = vmatpush1.msra.mxu0 0.0
    %166 = vmatprep.subr.mxu0 0.0
    %167 = vmatpush1.msra.mxu0 0.0
    %168 = vmatprep.subr.mxu0 0.0
    %169 = vmatpush1.msra.mxu0 0.0
    %170 = vmatprep.subr.mxu0 0.0
    %171 = vmatpush1.msra.mxu0 0.0
    %172 = vmatprep.subr.mxu0 0.0
    %173 = vmatpush1.msra.mxu0 0.0
    %174 = vmatprep.subr.mxu0 0.0
    %175 = vmatpush1.msra.mxu0 0.0
    %176 = vmatprep.subr.mxu0 0.0
    %177 = vmatpush1.msra.mxu0 0.0
    %178 = vmatprep.subr.mxu0 0.0
    %179 = vmatpush1.msra.mxu0 0.0
    %180 = vmatprep.subr.mxu0 0.0
    %181 = vmatpush1.msra.mxu0 0.0
    %182 = vmatprep.subr.mxu0 0.0
    %183 = vmatpush1.msra.mxu0 0.0
    %184 = vmatprep.subr.mxu0 0.0
    %185 = vmatpush1.msra.mxu0 0.0
    %186 = vmatprep.subr.mxu0 0.0
    %187 = vmatpush1.msra.mxu0 0.0
    %188 = vmatprep.mubr.f32.mxu0 0.0
    %189 = vmatmul.mubr.f32.gmra.mrb[0].mxu0 %v51
    %v190 = vpop.f32.mrb[0].mxu0
    %v191 = vadd.f32 0.0, %v190
    %v192 = vpop.f32.mrb[0].mxu0
    %193 = vdwg.mxu0
    %v195 = vcombine.high %v191, %v191
    %v197 = vunpack.c.l.s4 1966171168
    %v198 = vunpack.c.0.s8 %v197
    %v199 = vlaneseq
    %v200 = vshrl.u32 %v199, 7
    %v201 = vsub.s32 %v198, %v200
    %v202 = vrot.slane %v191, %v201
    %v204 = vunpack.c.l.s4 1966171168
    %v205 = vunpack.c.0.s8 %v204
    %v206 = vlaneseq
    %v207 = vshrl.u32 %v206, 7
    %v208 = vsub.s32 %v205, %v207
    %v209 = vrot.slane %v195, %v208
    %v210 = vcombine.high %v202, %v202
    %v212 = vunpack.c.l.s4 1966171168
    %v213 = vunpack.c.0.s8 %v212
    %v214 = vlaneseq
    %v215 = vshrl.u32 %v214, 7
    %v216 = vsub.s32 %v213, %v215
    %v217 = vrot.slane %v202, %v216
    %v219 = vunpack.c.l.s4 1966171168
    %v220 = vunpack.c.0.s8 %v219
    %v221 = vlaneseq
    %v222 = vshrl.u32 %v221, 7
    %v223 = vsub.s32 %v220, %v222
    %v224 = vrot.slane %v209, %v223
    %v226 = vunpack.c.l.s4 1966171168
    %v227 = vunpack.c.0.s8 %v226
    %v228 = vlaneseq
    %v229 = vshrl.u32 %v228, 7
    %v230 = vsub.s32 %v227, %v229
    %v231 = vrot.slane %v210, %v230
    %v232 = vcombine.high %v217, %v217
    %v233 = vcombine.high %v231, %v231
    %v234 = vlaneseq
    %v235 = vshrl.u32 %v234, 7
    %v236 = vsub.s32 0, %v235
    %v237 = vrot.slane %v217, %v236
    %v238 = vlaneseq
    %v239 = vshrl.u32 %v238, 7
    %v240 = vsub.s32 0, %v239
    %v241 = vrot.slane %v231, %v240
    %v242 = vlaneseq
    %v243 = vshrl.u32 %v242, 7
    %v244 = vsub.s32 0, %v243
    %v245 = vrot.slane %v232, %v244
    %v246 = vlaneseq
    %v247 = vshrl.u32 %v246, 7
    %v248 = vsub.s32 0, %v247
    %v249 = vrot.slane %v233, %v248
    %v250 = vlaneseq
    %v251 = vshrl.u32 %v250, 7
    %v252 = vsub.s32 0, %v251
    %v253 = vrot.slane %v224, %v252
    %v259 = vadd.f32 %v237, %v122
    %v260 = vadd.f32 %v241, %v122
    %v261 = vadd.f32 %v245, %v122
    %v262 = vadd.f32 %v249, %v122
    %v263 = vadd.f32 %v253, %v122
    %v264 = vadd.f32 %v259, %v40
    %v265 = vadd.f32 %v260, %v41
    %v266 = vadd.f32 %v261, %v42
    %v267 = vadd.f32 %v262, %v43
    %v268 = vadd.f32 %v263, %v44
    %vm269 = vcmp.gt.f32.partialorder %v264, 0.0
    %vm270 = vcmp.gt.f32.partialorder %v265, 0.0
    %vm271 = vcmp.gt.f32.partialorder %v266, 0.0
    %vm272 = vcmp.gt.f32.partialorder %v267, 0.0
    %vm273 = vcmp.gt.f32.partialorder %v268, 0.0
    %v274 = vmul.f32 %v264, 0.2
    %v275 = vmul.f32 %v265, 0.2
    %v276 = vmul.f32 %v266, 0.2
    %v277 = vmul.f32 %v267, 0.2
    %v278 = vmul.f32 %v268, 0.2
    %v279 = vsel %vm269, %v264, %v274
    %v280 = vsel %vm270, %v265, %v275
    %v281 = vsel %vm271, %v266, %v276
    %v282 = vsel %vm272, %v267, %v277
    %v283 = vsel %vm273, %v268, %v278
    %vm284 = vcmp.gt.f32.partialorder %v27, 0.0
    %vm285 = vcmp.gt.f32.partialorder %v28, 0.0
    %vm286 = vcmp.gt.f32.partialorder %v29, 0.0
    %vm287 = vcmp.gt.f32.partialorder %v30, 0.0
    %vm288 = vcmp.gt.f32.partialorder %v31, 0.0
    %v289 = vsel %vm284, %v279, -1e+30
    %v290 = vsel %vm285, %v280, -1e+30
    %v291 = vsel %vm286, %v281, -1e+30
    %v292 = vsel %vm287, %v282, -1e+30
    %v293 = vsel %vm288, %v283, -1e+30
    %vm294 = vcmask 1044480
    %v295 = vsel %vm294, %v289, -inf
    %v296 = vrot.slane %v295, 4
    %v297 = vmax.f32 %v295, %v296
    %v298 = vrot.slane %v297, 2
    %v299 = vmax.f32 %v297, %v298
    %v300 = vrot.slane %v299, 1
    %v301 = vmax.f32 %v299, %v300
    %v302 = vsel %vm294, %v290, -inf
    %v303 = vrot.slane %v302, 4
    %v304 = vmax.f32 %v302, %v303
    %v305 = vrot.slane %v304, 2
    %v306 = vmax.f32 %v304, %v305
    %v307 = vrot.slane %v306, 1
    %v308 = vmax.f32 %v306, %v307
    %v309 = vsel %vm294, %v291, -inf
    %v310 = vrot.slane %v309, 4
    %v311 = vmax.f32 %v309, %v310
    %v312 = vrot.slane %v311, 2
    %v313 = vmax.f32 %v311, %v312
    %v314 = vrot.slane %v313, 1
    %v315 = vmax.f32 %v313, %v314
    %v316 = vsel %vm294, %v292, -inf
    %v317 = vrot.slane %v316, 4
    %v318 = vmax.f32 %v316, %v317
    %v319 = vrot.slane %v318, 2
    %v320 = vmax.f32 %v318, %v319
    %v321 = vrot.slane %v320, 1
    %v322 = vmax.f32 %v320, %v321
    %v323 = vsel %vm294, %v293, -inf
    %v324 = vrot.slane %v323, 4
    %v325 = vmax.f32 %v323, %v324
    %v326 = vrot.slane %v325, 2
    %v327 = vmax.f32 %v325, %v326
    %v328 = vrot.slane %v327, 1
    %v329 = vmax.f32 %v327, %v328
    %vm330 = vcmp.gt.f32.partialorder %v301, -5e+29
    %vm331 = vcmp.gt.f32.partialorder %v308, -5e+29
    %vm332 = vcmp.gt.f32.partialorder %v315, -5e+29
    %vm333 = vcmp.gt.f32.partialorder %v322, -5e+29
    %vm334 = vcmp.gt.f32.partialorder %v329, -5e+29
    %v335 = vsel %vm330, %v301, 0.0
    %v336 = vsel %vm331, %v308, 0.0
    %v337 = vsel %vm332, %v315, 0.0
    %v338 = vsel %vm333, %v322, 0.0
    %v339 = vsel %vm334, %v329, 0.0
    %v340 = vsub.f32 %v289, %v335
    %v341 = vsub.f32 %v290, %v336
    %v342 = vsub.f32 %v291, %v337
    %v343 = vsub.f32 %v292, %v338
    %v344 = vsub.f32 %v293, %v339
    %v345 = vmul.f32 %v340, 1.442695
    %v346 = vpow.pop %v345
    %v347 = vmul.f32 %v341, 1.442695
    %v348 = vpow.pop %v347
    %v349 = vmul.f32 %v342, 1.442695
    %v350 = vpow.pop %v349
    %v351 = vmul.f32 %v343, 1.442695
    %v352 = vpow.pop %v351
    %v353 = vmul.f32 %v344, 1.442695
    %v354 = vpow.pop %v353
    %v355 = vsel %vm294, %v346, 0.0
    %v356 = vrot.slane %v355, 4
    %v357 = vadd.f32 %v355, %v356
    %v358 = vrot.slane %v357, 2
    %v359 = vadd.f32 %v357, %v358
    %v360 = vrot.slane %v359, 1
    %v361 = vadd.f32 %v359, %v360
    %v362 = vsel %vm294, %v348, 0.0
    %v363 = vrot.slane %v362, 4
    %v364 = vadd.f32 %v362, %v363
    %v365 = vrot.slane %v364, 2
    %v366 = vadd.f32 %v364, %v365
    %v367 = vrot.slane %v366, 1
    %v368 = vadd.f32 %v366, %v367
    %v369 = vsel %vm294, %v350, 0.0
    %v370 = vrot.slane %v369, 4
    %v371 = vadd.f32 %v369, %v370
    %v372 = vrot.slane %v371, 2
    %v373 = vadd.f32 %v371, %v372
    %v374 = vrot.slane %v373, 1
    %v375 = vadd.f32 %v373, %v374
    %v376 = vsel %vm294, %v352, 0.0
    %v377 = vrot.slane %v376, 4
    %v378 = vadd.f32 %v376, %v377
    %v379 = vrot.slane %v378, 2
    %v380 = vadd.f32 %v378, %v379
    %v381 = vrot.slane %v380, 1
    %v382 = vadd.f32 %v380, %v381
    %v383 = vsel %vm294, %v354, 0.0
    %v384 = vrot.slane %v383, 4
    %v385 = vadd.f32 %v383, %v384
    %v386 = vrot.slane %v385, 2
    %v387 = vadd.f32 %v385, %v386
    %v388 = vrot.slane %v387, 1
    %v389 = vadd.f32 %v387, %v388
    %v390 = vmul.f32 %v346, %v120
    %v391 = vmul.f32 %v348, %v120
    %v392 = vmul.f32 %v350, %v120
    %v393 = vmul.f32 %v352, %v120
    %v394 = vmul.f32 %v354, %v120
    %v395 = vsel %vm294, %v390, 0.0
    %v396 = vrot.slane %v395, 4
    %v397 = vadd.f32 %v395, %v396
    %v398 = vrot.slane %v397, 2
    %v399 = vadd.f32 %v397, %v398
    %v400 = vrot.slane %v399, 1
    %v401 = vadd.f32 %v399, %v400
    %v402 = vsel %vm294, %v391, 0.0
    %v403 = vrot.slane %v402, 4
    %v404 = vadd.f32 %v402, %v403
    %v405 = vrot.slane %v404, 2
    %v406 = vadd.f32 %v404, %v405
    %v407 = vrot.slane %v406, 1
    %v408 = vadd.f32 %v406, %v407
    %v409 = vsel %vm294, %v392, 0.0
    %v410 = vrot.slane %v409, 4
    %v411 = vadd.f32 %v409, %v410
    %v412 = vrot.slane %v411, 2
    %v413 = vadd.f32 %v411, %v412
    %v414 = vrot.slane %v413, 1
    %v415 = vadd.f32 %v413, %v414
    %v416 = vsel %vm294, %v393, 0.0
    %v417 = vrot.slane %v416, 4
    %v418 = vadd.f32 %v416, %v417
    %v419 = vrot.slane %v418, 2
    %v420 = vadd.f32 %v418, %v419
    %v421 = vrot.slane %v420, 1
    %v422 = vadd.f32 %v420, %v421
    %v423 = vsel %vm294, %v394, 0.0
    %v424 = vrot.slane %v423, 4
    %v425 = vadd.f32 %v423, %v424
    %v426 = vrot.slane %v425, 2
    %v427 = vadd.f32 %v425, %v426
    %v428 = vrot.slane %v427, 1
    %v429 = vadd.f32 %v427, %v428
    %vm430 = vcmp.gt.f32.partialorder %v361, 0.0
    %vm431 = vcmp.gt.f32.partialorder %v368, 0.0
    %vm432 = vcmp.gt.f32.partialorder %v375, 0.0
    %vm433 = vcmp.gt.f32.partialorder %v382, 0.0
    %vm434 = vcmp.gt.f32.partialorder %v389, 0.0
    %v435 = vsel %vm430, %v361, 1.0
    %v436 = vsel %vm431, %v368, 1.0
    %v437 = vsel %vm432, %v375, 1.0
    %v438 = vsel %vm433, %v382, 1.0
    %v439 = vsel %vm434, %v389, 1.0
    %v440 = vrcp.pop %v435
    %v441 = vrcp.pop %v436
    %v442 = vrcp.pop %v437
    %v443 = vrcp.pop %v438
    %v444 = vrcp.pop %v439
    %v445 = vmul.f32 %v401, %v440
    %v446 = vmul.f32 %v408, %v441
    %v447 = vmul.f32 %v415, %v442
    %v448 = vmul.f32 %v422, %v443
    %v449 = vmul.f32 %v429, %v444
    %v450 = vadd.f32 %v445, %v48
    %v451 = vadd.f32 %v446, %v48
    %v452 = vadd.f32 %v447, %v48
    %v453 = vadd.f32 %v448, %v48
    %v454 = vadd.f32 %v449, %v48
    %v455 = vmax.f32 %v450, 0.0
    %v456 = vmax.f32 %v451, 0.0
    %v457 = vmax.f32 %v452, 0.0
    %v458 = vmax.f32 %v453, 0.0
    %v459 = vmax.f32 %v454, 0.0
    %s460 = scalar_lea.vmem %s4, 120
    %v461 = vld [vmem:[%s460] sm:$0x1f]
    %v462 = vld [vmem:[%s460 + $0x8] sm:$0x1f]
    %v463 = vld [vmem:[%s460 + $0x10] sm:$0x1f]
    %v464 = vld [vmem:[%s460 + $0x18] sm:$0x1f]
    %v465 = vld [vmem:[%s460 + $0x20] sm:$0x1f]
    %v466 = vld [vmem:[%s2] sm:$0xff]
    %v467 = vld [vmem:[%s2 + $0x8] sm:$0xff]
    %v468 = vld [vmem:[%s2 + $0x10] sm:$0xff]
    %v469 = vld [vmem:[%s2 + $0x18] sm:$0xff]
    %v470 = vld [vmem:[%s2 + $0x20] sm:$0xff]
    %v471 = vld [vmem:[%s2 + $0x28] sm:$0xff]
    %v472 = vld [vmem:[%s2 + $0x30] sm:$0xff]
    %v473 = vld [vmem:[%s2 + $0x38] sm:$0xff]
    %v474 = vld [vmem:[%s2 + $0x40] sm:$0xff]
    %v475 = vld [vmem:[%s2 + $0x48] sm:$0xff]
    %v476 = vld [vmem:[%s2 + $0x50] sm:$0xff]
    %v477 = vld [vmem:[%s2 + $0x58] sm:$0xff]
    %v478 = vld [vmem:[%s2 + $0x60] sm:$0xff]
    %v479 = vld [vmem:[%s2 + $0x68] sm:$0xff]
    %v480 = vld [vmem:[%s2 + $0x70] sm:$0xff]
    %v481 = vld [vmem:[%s2 + $0x78] sm:$0xff]
    %v482 = vld [vmem:[%s2 + $0x80] sm:$0xff]
    %v483 = vld [vmem:[%s2 + $0x88] sm:$0xff]
    %v484 = vld [vmem:[%s2 + $0x90] sm:$0xff]
    %v485 = vld [vmem:[%s2 + $0x98] sm:$0xff]
    %v486 = vld [vmem:[%s2 + $0xa0] sm:$0xff]
    %v487 = vld [vmem:[%s2 + $0xa8] sm:$0xff]
    %v488 = vld [vmem:[%s2 + $0xb0] sm:$0xff]
    %v489 = vld [vmem:[%s2 + $0xb8] sm:$0xff]
    %v490 = vld [vmem:[%s2 + $0xc0] sm:$0xff]
    %v491 = vld [vmem:[%s2 + $0xc8] sm:$0xff]
    %v492 = vld [vmem:[%s2 + $0xd0] sm:$0xff]
    %v493 = vld [vmem:[%s2 + $0xd8] sm:$0xff]
    %v494 = vld [vmem:[%s2 + $0xe0] sm:$0xff]
    %v495 = vld [vmem:[%s2 + $0xe8] sm:$0xff]
    %v496 = vld [vmem:[%s2 + $0xf0] sm:$0xff]
    %v497 = vld [vmem:[%s2 + $0xf8] sm:$0xff]
    %v498 = vld [vmem:[%s2 + $0x100] sm:$0xff]
    %v499 = vld [vmem:[%s2 + $0x108] sm:$0xff]
    %v500 = vld [vmem:[%s2 + $0x110] sm:$0xff]
    %v501 = vld [vmem:[%s2 + $0x118] sm:$0xff]
    %v502 = vld [vmem:[%s2 + $0x120] sm:$0xff]
    %v503 = vld [vmem:[%s2 + $0x128] sm:$0xff]
    %v504 = vld [vmem:[%s2 + $0x130] sm:$0xff]
    %v505 = vld [vmem:[%s2 + $0x138] sm:$0xff]
    %v506 = vld [vmem:[%s2 + $0x140] sm:$0xff]
    %v507 = vld [vmem:[%s2 + $0x148] sm:$0xff]
    %v508 = vld [vmem:[%s2 + $0x150] sm:$0xff]
    %v509 = vld [vmem:[%s2 + $0x158] sm:$0xff]
    %v510 = vld [vmem:[%s2 + $0x160] sm:$0xff]
    %v511 = vld [vmem:[%s2 + $0x168] sm:$0xff]
    %v512 = vld [vmem:[%s2 + $0x170] sm:$0xff]
    %v513 = vld [vmem:[%s2 + $0x178] sm:$0xff]
    %v514 = vld [vmem:[%s2 + $0x180] ss:$0 sm:$0xff]
    %v520 = vrot.slane %v456, 7
    %vm521 = vcmask 1041409
    %v522 = vsel %vm521, %v520, %v455
    %v523 = vrot.slane %v457, 6
    %vm524 = vcmask 1042434
    %v525 = vsel %vm524, %v523, %v522
    %v526 = vrot.slane %v458, 5
    %vm527 = vcmask 1043459
    %v528 = vsel %vm527, %v526, %v525
    %v529 = vrot.slane %v459, 4
    %vm530 = vcmask 1044484
    %v531 = vsel %vm530, %v529, %v528
    %533 = vmatprep.subr.mxu0 %v467
    %534 = vmatpush1.msra.mxu0 %v466
    %535 = vmatprep.subr.mxu0 %v470
    %536 = vmatpush1.msra.mxu0 %v469
    %537 = vmatprep.subr.mxu0 %v473
    %538 = vmatpush1.msra.mxu0 %v472
    %539 = vmatprep.subr.mxu0 %v476
    %540 = vmatpush1.msra.mxu0 %v475
    %541 = vmatprep.subr.mxu0 %v479
    %542 = vmatpush1.msra.mxu0 %v478
    %543 = vmatprep.subr.mxu0 %v482
    %544 = vmatpush1.msra.mxu0 %v481
    %545 = vmatprep.subr.mxu0 %v485
    %546 = vmatpush1.msra.mxu0 %v484
    %547 = vmatprep.subr.mxu0 %v488
    %548 = vmatpush1.msra.mxu0 %v487
    %549 = vmatprep.subr.mxu0 %v491
    %550 = vmatpush1.msra.mxu0 %v490
    %551 = vmatprep.subr.mxu0 %v494
    %552 = vmatpush1.msra.mxu0 %v493
    %553 = vmatprep.subr.mxu0 %v497
    %554 = vmatpush1.msra.mxu0 %v496
    %555 = vmatprep.subr.mxu0 %v500
    %556 = vmatpush1.msra.mxu0 %v499
    %557 = vmatprep.subr.mxu0 %v503
    %558 = vmatpush1.msra.mxu0 %v502
    %559 = vmatprep.subr.mxu0 %v506
    %560 = vmatpush1.msra.mxu0 %v505
    %561 = vmatprep.subr.mxu0 %v509
    %562 = vmatpush1.msra.mxu0 %v508
    %563 = vmatprep.subr.mxu0 %v512
    %564 = vmatpush1.msra.mxu0 %v511
    %565 = vmatprep.subr.mxu0 0.0
    %566 = vmatpush1.msra.mxu0 0.0
    %567 = vmatprep.subr.mxu0 0.0
    %568 = vmatpush1.msra.mxu0 0.0
    %569 = vmatprep.subr.mxu0 0.0
    %570 = vmatpush1.msra.mxu0 0.0
    %571 = vmatprep.subr.mxu0 0.0
    %572 = vmatpush1.msra.mxu0 0.0
    %573 = vmatprep.subr.mxu0 0.0
    %574 = vmatpush1.msra.mxu0 0.0
    %575 = vmatprep.subr.mxu0 0.0
    %576 = vmatpush1.msra.mxu0 0.0
    %577 = vmatprep.subr.mxu0 0.0
    %578 = vmatpush1.msra.mxu0 0.0
    %579 = vmatprep.subr.mxu0 0.0
    %580 = vmatpush1.msra.mxu0 0.0
    %581 = vmatprep.subr.mxu0 0.0
    %582 = vmatpush1.msra.mxu0 0.0
    %583 = vmatprep.subr.mxu0 0.0
    %584 = vmatpush1.msra.mxu0 0.0
    %585 = vmatprep.subr.mxu0 0.0
    %586 = vmatpush1.msra.mxu0 0.0
    %587 = vmatprep.subr.mxu0 0.0
    %588 = vmatpush1.msra.mxu0 0.0
    %589 = vmatprep.subr.mxu0 0.0
    %590 = vmatpush1.msra.mxu0 0.0
    %591 = vmatprep.subr.mxu0 0.0
    %592 = vmatpush1.msra.mxu0 0.0
    %593 = vmatprep.subr.mxu0 0.0
    %594 = vmatpush1.msra.mxu0 0.0
    %595 = vmatprep.subr.mxu0 0.0
    %596 = vmatpush1.msra.mxu0 0.0
    %597 = vmatprep.mubr.f32.mxu0 0.0
    %598 = vmatmul.mubr.f32.gmra.mrb[0].mxu0 %v531
    %v599 = vpop.f32.mrb[0].mxu0
    %v600 = vadd.f32 0.0, %v599
    %v601 = vpop.f32.mrb[0].mxu0
    %v602 = vadd.f32 0.0, %v601
    %603 = vdwg.mxu0
    %604 = vmatprep.subr.mxu0 0.0
    %605 = vmatpush1.msra.mxu0 %v468
    %606 = vmatprep.subr.mxu0 0.0
    %607 = vmatpush1.msra.mxu0 %v471
    %608 = vmatprep.subr.mxu0 0.0
    %609 = vmatpush1.msra.mxu0 %v474
    %610 = vmatprep.subr.mxu0 0.0
    %611 = vmatpush1.msra.mxu0 %v477
    %612 = vmatprep.subr.mxu0 0.0
    %613 = vmatpush1.msra.mxu0 %v480
    %614 = vmatprep.subr.mxu0 0.0
    %615 = vmatpush1.msra.mxu0 %v483
    %616 = vmatprep.subr.mxu0 0.0
    %617 = vmatpush1.msra.mxu0 %v486
    %618 = vmatprep.subr.mxu0 0.0
    %619 = vmatpush1.msra.mxu0 %v489
    %620 = vmatprep.subr.mxu0 0.0
    %621 = vmatpush1.msra.mxu0 %v492
    %622 = vmatprep.subr.mxu0 0.0
    %623 = vmatpush1.msra.mxu0 %v495
    %624 = vmatprep.subr.mxu0 0.0
    %625 = vmatpush1.msra.mxu0 %v498
    %626 = vmatprep.subr.mxu0 0.0
    %627 = vmatpush1.msra.mxu0 %v501
    %628 = vmatprep.subr.mxu0 0.0
    %629 = vmatpush1.msra.mxu0 %v504
    %630 = vmatprep.subr.mxu0 0.0
    %631 = vmatpush1.msra.mxu0 %v507
    %632 = vmatprep.subr.mxu0 0.0
    %633 = vmatpush1.msra.mxu0 %v510
    %634 = vmatprep.subr.mxu0 0.0
    %635 = vmatpush1.msra.mxu0 %v513
    %636 = vmatprep.subr.mxu0 0.0
    %637 = vmatpush1.msra.mxu0 0.0
    %638 = vmatprep.subr.mxu0 0.0
    %639 = vmatpush1.msra.mxu0 0.0
    %640 = vmatprep.subr.mxu0 0.0
    %641 = vmatpush1.msra.mxu0 0.0
    %642 = vmatprep.subr.mxu0 0.0
    %643 = vmatpush1.msra.mxu0 0.0
    %644 = vmatprep.subr.mxu0 0.0
    %645 = vmatpush1.msra.mxu0 0.0
    %646 = vmatprep.subr.mxu0 0.0
    %647 = vmatpush1.msra.mxu0 0.0
    %648 = vmatprep.subr.mxu0 0.0
    %649 = vmatpush1.msra.mxu0 0.0
    %650 = vmatprep.subr.mxu0 0.0
    %651 = vmatpush1.msra.mxu0 0.0
    %652 = vmatprep.subr.mxu0 0.0
    %653 = vmatpush1.msra.mxu0 0.0
    %654 = vmatprep.subr.mxu0 0.0
    %655 = vmatpush1.msra.mxu0 0.0
    %656 = vmatprep.subr.mxu0 0.0
    %657 = vmatpush1.msra.mxu0 0.0
    %658 = vmatprep.subr.mxu0 0.0
    %659 = vmatpush1.msra.mxu0 0.0
    %660 = vmatprep.subr.mxu0 0.0
    %661 = vmatpush1.msra.mxu0 0.0
    %662 = vmatprep.subr.mxu0 0.0
    %663 = vmatpush1.msra.mxu0 0.0
    %664 = vmatprep.subr.mxu0 0.0
    %665 = vmatpush1.msra.mxu0 0.0
    %666 = vmatprep.subr.mxu0 0.0
    %667 = vmatpush1.msra.mxu0 0.0
    %668 = vmatprep.mubr.f32.mxu0 0.0
    %669 = vmatmul.mubr.f32.gmra.mrb[0].mxu0 %v531
    %v670 = vpop.f32.mrb[0].mxu0
    %v671 = vadd.f32 0.0, %v670
    %v672 = vpop.f32.mrb[0].mxu0
    %673 = vdwg.mxu0
    %v675 = vcombine.high %v671, %v671
    %v677 = vunpack.c.l.s4 1966171168
    %v678 = vunpack.c.0.s8 %v677
    %v679 = vlaneseq
    %v680 = vshrl.u32 %v679, 7
    %v681 = vsub.s32 %v678, %v680
    %v682 = vrot.slane %v671, %v681
    %v684 = vunpack.c.l.s4 1966171168
    %v685 = vunpack.c.0.s8 %v684
    %v686 = vlaneseq
    %v687 = vshrl.u32 %v686, 7
    %v688 = vsub.s32 %v685, %v687
    %v689 = vrot.slane %v675, %v688
    %v690 = vcombine.high %v682, %v682
    %v692 = vunpack.c.l.s4 1966171168
    %v693 = vunpack.c.0.s8 %v692
    %v694 = vlaneseq
    %v695 = vshrl.u32 %v694, 7
    %v696 = vsub.s32 %v693, %v695
    %v697 = vrot.slane %v682, %v696
    %v699 = vunpack.c.l.s4 1966171168
    %v700 = vunpack.c.0.s8 %v699
    %v701 = vlaneseq
    %v702 = vshrl.u32 %v701, 7
    %v703 = vsub.s32 %v700, %v702
    %v704 = vrot.slane %v689, %v703
    %v706 = vunpack.c.l.s4 1966171168
    %v707 = vunpack.c.0.s8 %v706
    %v708 = vlaneseq
    %v709 = vshrl.u32 %v708, 7
    %v710 = vsub.s32 %v707, %v709
    %v711 = vrot.slane %v690, %v710
    %v712 = vcombine.high %v697, %v697
    %v713 = vcombine.high %v711, %v711
    %v714 = vlaneseq
    %v715 = vshrl.u32 %v714, 7
    %v716 = vsub.s32 0, %v715
    %v717 = vrot.slane %v697, %v716
    %v718 = vlaneseq
    %v719 = vshrl.u32 %v718, 7
    %v720 = vsub.s32 0, %v719
    %v721 = vrot.slane %v711, %v720
    %v722 = vlaneseq
    %v723 = vshrl.u32 %v722, 7
    %v724 = vsub.s32 0, %v723
    %v725 = vrot.slane %v712, %v724
    %v726 = vlaneseq
    %v727 = vshrl.u32 %v726, 7
    %v728 = vsub.s32 0, %v727
    %v729 = vrot.slane %v713, %v728
    %v730 = vlaneseq
    %v731 = vshrl.u32 %v730, 7
    %v732 = vsub.s32 0, %v731
    %v733 = vrot.slane %v704, %v732
    %v739 = vadd.f32 %v717, %v602
    %v740 = vadd.f32 %v721, %v602
    %v741 = vadd.f32 %v725, %v602
    %v742 = vadd.f32 %v729, %v602
    %v743 = vadd.f32 %v733, %v602
    %v744 = vadd.f32 %v739, %v461
    %v745 = vadd.f32 %v740, %v462
    %v746 = vadd.f32 %v741, %v463
    %v747 = vadd.f32 %v742, %v464
    %v748 = vadd.f32 %v743, %v465
    %vm749 = vcmp.gt.f32.partialorder %v744, 0.0
    %vm750 = vcmp.gt.f32.partialorder %v745, 0.0
    %vm751 = vcmp.gt.f32.partialorder %v746, 0.0
    %vm752 = vcmp.gt.f32.partialorder %v747, 0.0
    %vm753 = vcmp.gt.f32.partialorder %v748, 0.0
    %v754 = vmul.f32 %v744, 0.2
    %v755 = vmul.f32 %v745, 0.2
    %v756 = vmul.f32 %v746, 0.2
    %v757 = vmul.f32 %v747, 0.2
    %v758 = vmul.f32 %v748, 0.2
    %v759 = vsel %vm749, %v744, %v754
    %v760 = vsel %vm750, %v745, %v755
    %v761 = vsel %vm751, %v746, %v756
    %v762 = vsel %vm752, %v747, %v757
    %v763 = vsel %vm753, %v748, %v758
    %vm764 = vcmp.gt.f32.partialorder %v33, 0.0
    %vm765 = vcmp.gt.f32.partialorder %v34, 0.0
    %vm766 = vcmp.gt.f32.partialorder %v35, 0.0
    %vm767 = vcmp.gt.f32.partialorder %v36, 0.0
    %vm768 = vcmp.gt.f32.partialorder %v37, 0.0
    %v769 = vsel %vm764, %v759, -1e+30
    %v770 = vsel %vm765, %v760, -1e+30
    %v771 = vsel %vm766, %v761, -1e+30
    %v772 = vsel %vm767, %v762, -1e+30
    %v773 = vsel %vm768, %v763, -1e+30
    %v774 = vsel %vm294, %v769, -inf
    %v775 = vrot.slane %v774, 4
    %v776 = vmax.f32 %v774, %v775
    %v777 = vrot.slane %v776, 2
    %v778 = vmax.f32 %v776, %v777
    %v779 = vrot.slane %v778, 1
    %v780 = vmax.f32 %v778, %v779
    %v781 = vsel %vm294, %v770, -inf
    %v782 = vrot.slane %v781, 4
    %v783 = vmax.f32 %v781, %v782
    %v784 = vrot.slane %v783, 2
    %v785 = vmax.f32 %v783, %v784
    %v786 = vrot.slane %v785, 1
    %v787 = vmax.f32 %v785, %v786
    %v788 = vsel %vm294, %v771, -inf
    %v789 = vrot.slane %v788, 4
    %v790 = vmax.f32 %v788, %v789
    %v791 = vrot.slane %v790, 2
    %v792 = vmax.f32 %v790, %v791
    %v793 = vrot.slane %v792, 1
    %v794 = vmax.f32 %v792, %v793
    %v795 = vsel %vm294, %v772, -inf
    %v796 = vrot.slane %v795, 4
    %v797 = vmax.f32 %v795, %v796
    %v798 = vrot.slane %v797, 2
    %v799 = vmax.f32 %v797, %v798
    %v800 = vrot.slane %v799, 1
    %v801 = vmax.f32 %v799, %v800
    %v802 = vsel %vm294, %v773, -inf
    %v803 = vrot.slane %v802, 4
    %v804 = vmax.f32 %v802, %v803
    %v805 = vrot.slane %v804, 2
    %v806 = vmax.f32 %v804, %v805
    %v807 = vrot.slane %v806, 1
    %v808 = vmax.f32 %v806, %v807
    %vm809 = vcmp.gt.f32.partialorder %v780, -5e+29
    %vm810 = vcmp.gt.f32.partialorder %v787, -5e+29
    %vm811 = vcmp.gt.f32.partialorder %v794, -5e+29
    %vm812 = vcmp.gt.f32.partialorder %v801, -5e+29
    %vm813 = vcmp.gt.f32.partialorder %v808, -5e+29
    %v814 = vsel %vm809, %v780, 0.0
    %v815 = vsel %vm810, %v787, 0.0
    %v816 = vsel %vm811, %v794, 0.0
    %v817 = vsel %vm812, %v801, 0.0
    %v818 = vsel %vm813, %v808, 0.0
    %v819 = vsub.f32 %v769, %v814
    %v820 = vsub.f32 %v770, %v815
    %v821 = vsub.f32 %v771, %v816
    %v822 = vsub.f32 %v772, %v817
    %v823 = vsub.f32 %v773, %v818
    %v824 = vmul.f32 %v819, 1.442695
    %v825 = vpow.pop %v824
    %v826 = vmul.f32 %v820, 1.442695
    %v827 = vpow.pop %v826
    %v828 = vmul.f32 %v821, 1.442695
    %v829 = vpow.pop %v828
    %v830 = vmul.f32 %v822, 1.442695
    %v831 = vpow.pop %v830
    %v832 = vmul.f32 %v823, 1.442695
    %v833 = vpow.pop %v832
    %v834 = vsel %vm294, %v825, 0.0
    %v835 = vrot.slane %v834, 4
    %v836 = vadd.f32 %v834, %v835
    %v837 = vrot.slane %v836, 2
    %v838 = vadd.f32 %v836, %v837
    %v839 = vrot.slane %v838, 1
    %v840 = vadd.f32 %v838, %v839
    %v841 = vsel %vm294, %v827, 0.0
    %v842 = vrot.slane %v841, 4
    %v843 = vadd.f32 %v841, %v842
    %v844 = vrot.slane %v843, 2
    %v845 = vadd.f32 %v843, %v844
    %v846 = vrot.slane %v845, 1
    %v847 = vadd.f32 %v845, %v846
    %v848 = vsel %vm294, %v829, 0.0
    %v849 = vrot.slane %v848, 4
    %v850 = vadd.f32 %v848, %v849
    %v851 = vrot.slane %v850, 2
    %v852 = vadd.f32 %v850, %v851
    %v853 = vrot.slane %v852, 1
    %v854 = vadd.f32 %v852, %v853
    %v855 = vsel %vm294, %v831, 0.0
    %v856 = vrot.slane %v855, 4
    %v857 = vadd.f32 %v855, %v856
    %v858 = vrot.slane %v857, 2
    %v859 = vadd.f32 %v857, %v858
    %v860 = vrot.slane %v859, 1
    %v861 = vadd.f32 %v859, %v860
    %v862 = vsel %vm294, %v833, 0.0
    %v863 = vrot.slane %v862, 4
    %v864 = vadd.f32 %v862, %v863
    %v865 = vrot.slane %v864, 2
    %v866 = vadd.f32 %v864, %v865
    %v867 = vrot.slane %v866, 1
    %v868 = vadd.f32 %v866, %v867
    %v869 = vmul.f32 %v825, %v600
    %v870 = vmul.f32 %v827, %v600
    %v871 = vmul.f32 %v829, %v600
    %v872 = vmul.f32 %v831, %v600
    %v873 = vmul.f32 %v833, %v600
    %v874 = vsel %vm294, %v869, 0.0
    %v875 = vrot.slane %v874, 4
    %v876 = vadd.f32 %v874, %v875
    %v877 = vrot.slane %v876, 2
    %v878 = vadd.f32 %v876, %v877
    %v879 = vrot.slane %v878, 1
    %v880 = vadd.f32 %v878, %v879
    %v881 = vsel %vm294, %v870, 0.0
    %v882 = vrot.slane %v881, 4
    %v883 = vadd.f32 %v881, %v882
    %v884 = vrot.slane %v883, 2
    %v885 = vadd.f32 %v883, %v884
    %v886 = vrot.slane %v885, 1
    %v887 = vadd.f32 %v885, %v886
    %v888 = vsel %vm294, %v871, 0.0
    %v889 = vrot.slane %v888, 4
    %v890 = vadd.f32 %v888, %v889
    %v891 = vrot.slane %v890, 2
    %v892 = vadd.f32 %v890, %v891
    %v893 = vrot.slane %v892, 1
    %v894 = vadd.f32 %v892, %v893
    %v895 = vsel %vm294, %v872, 0.0
    %v896 = vrot.slane %v895, 4
    %v897 = vadd.f32 %v895, %v896
    %v898 = vrot.slane %v897, 2
    %v899 = vadd.f32 %v897, %v898
    %v900 = vrot.slane %v899, 1
    %v901 = vadd.f32 %v899, %v900
    %v902 = vsel %vm294, %v873, 0.0
    %v903 = vrot.slane %v902, 4
    %v904 = vadd.f32 %v902, %v903
    %v905 = vrot.slane %v904, 2
    %v906 = vadd.f32 %v904, %v905
    %v907 = vrot.slane %v906, 1
    %v908 = vadd.f32 %v906, %v907
    %vm909 = vcmp.gt.f32.partialorder %v840, 0.0
    %vm910 = vcmp.gt.f32.partialorder %v847, 0.0
    %vm911 = vcmp.gt.f32.partialorder %v854, 0.0
    %vm912 = vcmp.gt.f32.partialorder %v861, 0.0
    %vm913 = vcmp.gt.f32.partialorder %v868, 0.0
    %v914 = vsel %vm909, %v840, 1.0
    %v915 = vsel %vm910, %v847, 1.0
    %v916 = vsel %vm911, %v854, 1.0
    %v917 = vsel %vm912, %v861, 1.0
    %v918 = vsel %vm913, %v868, 1.0
    %v919 = vrcp.pop %v914
    %v920 = vrcp.pop %v915
    %v921 = vrcp.pop %v916
    %v922 = vrcp.pop %v917
    %v923 = vrcp.pop %v918
    %v924 = vmul.f32 %v880, %v919
    %v925 = vmul.f32 %v887, %v920
    %v926 = vmul.f32 %v894, %v921
    %v927 = vmul.f32 %v901, %v922
    %v928 = vmul.f32 %v908, %v923
    %v929 = vadd.f32 %v924, %v514
    %v930 = vadd.f32 %v925, %v514
    %v931 = vadd.f32 %v926, %v514
    %v932 = vadd.f32 %v927, %v514
    %v933 = vadd.f32 %v928, %v514
    %v934 = vmax.f32 %v929, 0.0
    %v935 = vmax.f32 %v930, 0.0
    %v936 = vmax.f32 %v931, 0.0
    %v937 = vmax.f32 %v932, 0.0
    %v938 = vmax.f32 %v933, 0.0
    %s939 = scalar_lea.vmem %s4, 160
    %v940 = vld [vmem:[%s939] sm:$0x1f]
    %v941 = vld [vmem:[%s939 + $0x8] sm:$0x1f]
    %v942 = vld [vmem:[%s939 + $0x10] sm:$0x1f]
    %v943 = vld [vmem:[%s939 + $0x18] sm:$0x1f]
    %v944 = vld [vmem:[%s939 + $0x20] sm:$0x1f]
    %v945 = vld [vmem:[%s3] sm:$0xff]
    %v946 = vld [vmem:[%s3 + $0x8] sm:$0xff]
    %v947 = vld [vmem:[%s3 + $0x10] sm:$0xff]
    %v948 = vld [vmem:[%s3 + $0x18] sm:$0xff]
    %v949 = vld [vmem:[%s3 + $0x20] sm:$0xff]
    %v950 = vld [vmem:[%s3 + $0x28] sm:$0xff]
    %v951 = vld [vmem:[%s3 + $0x30] sm:$0xff]
    %v952 = vld [vmem:[%s3 + $0x38] sm:$0xff]
    %v953 = vld [vmem:[%s3 + $0x40] sm:$0xff]
    %v954 = vld [vmem:[%s3 + $0x48] sm:$0xff]
    %v955 = vld [vmem:[%s3 + $0x50] sm:$0xff]
    %v956 = vld [vmem:[%s3 + $0x58] sm:$0xff]
    %v957 = vld [vmem:[%s3 + $0x60] sm:$0xff]
    %v958 = vld [vmem:[%s3 + $0x68] sm:$0xff]
    %v959 = vld [vmem:[%s3 + $0x70] sm:$0xff]
    %v960 = vld [vmem:[%s3 + $0x78] sm:$0xff]
    %v961 = vld [vmem:[%s3 + $0x80] sm:$0xff]
    %v962 = vld [vmem:[%s3 + $0x88] sm:$0xff]
    %v963 = vld [vmem:[%s3 + $0x90] sm:$0xff]
    %v964 = vld [vmem:[%s3 + $0x98] sm:$0xff]
    %v965 = vld [vmem:[%s3 + $0xa0] sm:$0xff]
    %v966 = vld [vmem:[%s3 + $0xa8] sm:$0xff]
    %v967 = vld [vmem:[%s3 + $0xb0] sm:$0xff]
    %v968 = vld [vmem:[%s3 + $0xb8] sm:$0xff]
    %v969 = vld [vmem:[%s3 + $0xc0] sm:$0xff]
    %v970 = vld [vmem:[%s3 + $0xc8] sm:$0xff]
    %v971 = vld [vmem:[%s3 + $0xd0] sm:$0xff]
    %v972 = vld [vmem:[%s3 + $0xd8] sm:$0xff]
    %v973 = vld [vmem:[%s3 + $0xe0] sm:$0xff]
    %v974 = vld [vmem:[%s3 + $0xe8] sm:$0xff]
    %v975 = vld [vmem:[%s3 + $0xf0] sm:$0xff]
    %v976 = vld [vmem:[%s3 + $0xf8] sm:$0xff]
    %v977 = vld [vmem:[%s3 + $0x100] sm:$0xff]
    %v978 = vld [vmem:[%s3 + $0x108] sm:$0xff]
    %v979 = vld [vmem:[%s3 + $0x110] sm:$0xff]
    %v980 = vld [vmem:[%s3 + $0x118] sm:$0xff]
    %v981 = vld [vmem:[%s3 + $0x120] sm:$0xff]
    %v982 = vld [vmem:[%s3 + $0x128] sm:$0xff]
    %v983 = vld [vmem:[%s3 + $0x130] sm:$0xff]
    %v984 = vld [vmem:[%s3 + $0x138] sm:$0xff]
    %v985 = vld [vmem:[%s3 + $0x140] sm:$0xff]
    %v986 = vld [vmem:[%s3 + $0x148] sm:$0xff]
    %v987 = vld [vmem:[%s3 + $0x150] sm:$0xff]
    %v988 = vld [vmem:[%s3 + $0x158] sm:$0xff]
    %v989 = vld [vmem:[%s3 + $0x160] sm:$0xff]
    %v990 = vld [vmem:[%s3 + $0x168] sm:$0xff]
    %v991 = vld [vmem:[%s3 + $0x170] sm:$0xff]
    %v992 = vld [vmem:[%s3 + $0x178] sm:$0xff]
    %v993 = vld [vmem:[%s3 + $0x180] ss:$0 sm:$0xff]
    %v999 = vrot.slane %v935, 7
    %v1000 = vsel %vm521, %v999, %v934
    %v1001 = vrot.slane %v936, 6
    %v1002 = vsel %vm524, %v1001, %v1000
    %v1003 = vrot.slane %v937, 5
    %v1004 = vsel %vm527, %v1003, %v1002
    %v1005 = vrot.slane %v938, 4
    %v1006 = vsel %vm530, %v1005, %v1004
    %1008 = vmatprep.subr.mxu0 %v946
    %1009 = vmatpush1.msra.mxu0 %v945
    %1010 = vmatprep.subr.mxu0 %v949
    %1011 = vmatpush1.msra.mxu0 %v948
    %1012 = vmatprep.subr.mxu0 %v952
    %1013 = vmatpush1.msra.mxu0 %v951
    %1014 = vmatprep.subr.mxu0 %v955
    %1015 = vmatpush1.msra.mxu0 %v954
    %1016 = vmatprep.subr.mxu0 %v958
    %1017 = vmatpush1.msra.mxu0 %v957
    %1018 = vmatprep.subr.mxu0 %v961
    %1019 = vmatpush1.msra.mxu0 %v960
    %1020 = vmatprep.subr.mxu0 %v964
    %1021 = vmatpush1.msra.mxu0 %v963
    %1022 = vmatprep.subr.mxu0 %v967
    %1023 = vmatpush1.msra.mxu0 %v966
    %1024 = vmatprep.subr.mxu0 %v970
    %1025 = vmatpush1.msra.mxu0 %v969
    %1026 = vmatprep.subr.mxu0 %v973
    %1027 = vmatpush1.msra.mxu0 %v972
    %1028 = vmatprep.subr.mxu0 %v976
    %1029 = vmatpush1.msra.mxu0 %v975
    %1030 = vmatprep.subr.mxu0 %v979
    %1031 = vmatpush1.msra.mxu0 %v978
    %1032 = vmatprep.subr.mxu0 %v982
    %1033 = vmatpush1.msra.mxu0 %v981
    %1034 = vmatprep.subr.mxu0 %v985
    %1035 = vmatpush1.msra.mxu0 %v984
    %1036 = vmatprep.subr.mxu0 %v988
    %1037 = vmatpush1.msra.mxu0 %v987
    %1038 = vmatprep.subr.mxu0 %v991
    %1039 = vmatpush1.msra.mxu0 %v990
    %1040 = vmatprep.subr.mxu0 0.0
    %1041 = vmatpush1.msra.mxu0 0.0
    %1042 = vmatprep.subr.mxu0 0.0
    %1043 = vmatpush1.msra.mxu0 0.0
    %1044 = vmatprep.subr.mxu0 0.0
    %1045 = vmatpush1.msra.mxu0 0.0
    %1046 = vmatprep.subr.mxu0 0.0
    %1047 = vmatpush1.msra.mxu0 0.0
    %1048 = vmatprep.subr.mxu0 0.0
    %1049 = vmatpush1.msra.mxu0 0.0
    %1050 = vmatprep.subr.mxu0 0.0
    %1051 = vmatpush1.msra.mxu0 0.0
    %1052 = vmatprep.subr.mxu0 0.0
    %1053 = vmatpush1.msra.mxu0 0.0
    %1054 = vmatprep.subr.mxu0 0.0
    %1055 = vmatpush1.msra.mxu0 0.0
    %1056 = vmatprep.subr.mxu0 0.0
    %1057 = vmatpush1.msra.mxu0 0.0
    %1058 = vmatprep.subr.mxu0 0.0
    %1059 = vmatpush1.msra.mxu0 0.0
    %1060 = vmatprep.subr.mxu0 0.0
    %1061 = vmatpush1.msra.mxu0 0.0
    %1062 = vmatprep.subr.mxu0 0.0
    %1063 = vmatpush1.msra.mxu0 0.0
    %1064 = vmatprep.subr.mxu0 0.0
    %1065 = vmatpush1.msra.mxu0 0.0
    %1066 = vmatprep.subr.mxu0 0.0
    %1067 = vmatpush1.msra.mxu0 0.0
    %1068 = vmatprep.subr.mxu0 0.0
    %1069 = vmatpush1.msra.mxu0 0.0
    %1070 = vmatprep.subr.mxu0 0.0
    %1071 = vmatpush1.msra.mxu0 0.0
    %1072 = vmatprep.mubr.f32.mxu0 0.0
    %1073 = vmatmul.mubr.f32.gmra.mrb[0].mxu0 %v1006
    %v1074 = vpop.f32.mrb[0].mxu0
    %v1075 = vadd.f32 0.0, %v1074
    %v1076 = vpop.f32.mrb[0].mxu0
    %v1077 = vadd.f32 0.0, %v1076
    %1078 = vdwg.mxu0
    %1079 = vmatprep.subr.mxu0 0.0
    %1080 = vmatpush1.msra.mxu0 %v947
    %1081 = vmatprep.subr.mxu0 0.0
    %1082 = vmatpush1.msra.mxu0 %v950
    %1083 = vmatprep.subr.mxu0 0.0
    %1084 = vmatpush1.msra.mxu0 %v953
    %1085 = vmatprep.subr.mxu0 0.0
    %1086 = vmatpush1.msra.mxu0 %v956
    %1087 = vmatprep.subr.mxu0 0.0
    %1088 = vmatpush1.msra.mxu0 %v959
    %1089 = vmatprep.subr.mxu0 0.0
    %1090 = vmatpush1.msra.mxu0 %v962
    %1091 = vmatprep.subr.mxu0 0.0
    %1092 = vmatpush1.msra.mxu0 %v965
    %1093 = vmatprep.subr.mxu0 0.0
    %1094 = vmatpush1.msra.mxu0 %v968
    %1095 = vmatprep.subr.mxu0 0.0
    %1096 = vmatpush1.msra.mxu0 %v971
    %1097 = vmatprep.subr.mxu0 0.0
    %1098 = vmatpush1.msra.mxu0 %v974
    %1099 = vmatprep.subr.mxu0 0.0
    %1100 = vmatpush1.msra.mxu0 %v977
    %1101 = vmatprep.subr.mxu0 0.0
    %1102 = vmatpush1.msra.mxu0 %v980
    %1103 = vmatprep.subr.mxu0 0.0
    %1104 = vmatpush1.msra.mxu0 %v983
    %1105 = vmatprep.subr.mxu0 0.0
    %1106 = vmatpush1.msra.mxu0 %v986
    %1107 = vmatprep.subr.mxu0 0.0
    %1108 = vmatpush1.msra.mxu0 %v989
    %1109 = vmatprep.subr.mxu0 0.0
    %1110 = vmatpush1.msra.mxu0 %v992
    %1111 = vmatprep.subr.mxu0 0.0
    %1112 = vmatpush1.msra.mxu0 0.0
    %1113 = vmatprep.subr.mxu0 0.0
    %1114 = vmatpush1.msra.mxu0 0.0
    %1115 = vmatprep.subr.mxu0 0.0
    %1116 = vmatpush1.msra.mxu0 0.0
    %1117 = vmatprep.subr.mxu0 0.0
    %1118 = vmatpush1.msra.mxu0 0.0
    %1119 = vmatprep.subr.mxu0 0.0
    %1120 = vmatpush1.msra.mxu0 0.0
    %1121 = vmatprep.subr.mxu0 0.0
    %1122 = vmatpush1.msra.mxu0 0.0
    %1123 = vmatprep.subr.mxu0 0.0
    %1124 = vmatpush1.msra.mxu0 0.0
    %1125 = vmatprep.subr.mxu0 0.0
    %1126 = vmatpush1.msra.mxu0 0.0
    %1127 = vmatprep.subr.mxu0 0.0
    %1128 = vmatpush1.msra.mxu0 0.0
    %1129 = vmatprep.subr.mxu0 0.0
    %1130 = vmatpush1.msra.mxu0 0.0
    %1131 = vmatprep.subr.mxu0 0.0
    %1132 = vmatpush1.msra.mxu0 0.0
    %1133 = vmatprep.subr.mxu0 0.0
    %1134 = vmatpush1.msra.mxu0 0.0
    %1135 = vmatprep.subr.mxu0 0.0
    %1136 = vmatpush1.msra.mxu0 0.0
    %1137 = vmatprep.subr.mxu0 0.0
    %1138 = vmatpush1.msra.mxu0 0.0
    %1139 = vmatprep.subr.mxu0 0.0
    %1140 = vmatpush1.msra.mxu0 0.0
    %1141 = vmatprep.subr.mxu0 0.0
    %1142 = vmatpush1.msra.mxu0 0.0
    %1143 = vmatprep.mubr.f32.mxu0 0.0
    %1144 = vmatmul.mubr.f32.gmra.mrb[0].mxu0 %v1006
    %v1145 = vpop.f32.mrb[0].mxu0
    %v1146 = vadd.f32 0.0, %v1145
    %v1147 = vpop.f32.mrb[0].mxu0
    %1148 = vdwg.mxu0
    %v1150 = vcombine.high %v1146, %v1146
    %v1152 = vunpack.c.l.s4 1966171168
    %v1153 = vunpack.c.0.s8 %v1152
    %v1154 = vlaneseq
    %v1155 = vshrl.u32 %v1154, 7
    %v1156 = vsub.s32 %v1153, %v1155
    %v1157 = vrot.slane %v1146, %v1156
    %v1159 = vunpack.c.l.s4 1966171168
    %v1160 = vunpack.c.0.s8 %v1159
    %v1161 = vlaneseq
    %v1162 = vshrl.u32 %v1161, 7
    %v1163 = vsub.s32 %v1160, %v1162
    %v1164 = vrot.slane %v1150, %v1163
    %v1165 = vcombine.high %v1157, %v1157
    %v1167 = vunpack.c.l.s4 1966171168
    %v1168 = vunpack.c.0.s8 %v1167
    %v1169 = vlaneseq
    %v1170 = vshrl.u32 %v1169, 7
    %v1171 = vsub.s32 %v1168, %v1170
    %v1172 = vrot.slane %v1157, %v1171
    %v1174 = vunpack.c.l.s4 1966171168
    %v1175 = vunpack.c.0.s8 %v1174
    %v1176 = vlaneseq
    %v1177 = vshrl.u32 %v1176, 7
    %v1178 = vsub.s32 %v1175, %v1177
    %v1179 = vrot.slane %v1164, %v1178
    %v1181 = vunpack.c.l.s4 1966171168
    %v1182 = vunpack.c.0.s8 %v1181
    %v1183 = vlaneseq
    %v1184 = vshrl.u32 %v1183, 7
    %v1185 = vsub.s32 %v1182, %v1184
    %v1186 = vrot.slane %v1165, %v1185
    %v1187 = vcombine.high %v1172, %v1172
    %v1188 = vcombine.high %v1186, %v1186
    %v1189 = vlaneseq
    %v1190 = vshrl.u32 %v1189, 7
    %v1191 = vsub.s32 0, %v1190
    %v1192 = vrot.slane %v1172, %v1191
    %v1193 = vlaneseq
    %v1194 = vshrl.u32 %v1193, 7
    %v1195 = vsub.s32 0, %v1194
    %v1196 = vrot.slane %v1186, %v1195
    %v1197 = vlaneseq
    %v1198 = vshrl.u32 %v1197, 7
    %v1199 = vsub.s32 0, %v1198
    %v1200 = vrot.slane %v1187, %v1199
    %v1201 = vlaneseq
    %v1202 = vshrl.u32 %v1201, 7
    %v1203 = vsub.s32 0, %v1202
    %v1204 = vrot.slane %v1188, %v1203
    %v1205 = vlaneseq
    %v1206 = vshrl.u32 %v1205, 7
    %v1207 = vsub.s32 0, %v1206
    %v1208 = vrot.slane %v1179, %v1207
    %v1214 = vadd.f32 %v1192, %v1077
    %v1215 = vadd.f32 %v1196, %v1077
    %v1216 = vadd.f32 %v1200, %v1077
    %v1217 = vadd.f32 %v1204, %v1077
    %v1218 = vadd.f32 %v1208, %v1077
    %v1219 = vadd.f32 %v1214, %v940
    %v1220 = vadd.f32 %v1215, %v941
    %v1221 = vadd.f32 %v1216, %v942
    %v1222 = vadd.f32 %v1217, %v943
    %v1223 = vadd.f32 %v1218, %v944
    %vm1224 = vcmp.gt.f32.partialorder %v1219, 0.0
    %vm1225 = vcmp.gt.f32.partialorder %v1220, 0.0
    %vm1226 = vcmp.gt.f32.partialorder %v1221, 0.0
    %vm1227 = vcmp.gt.f32.partialorder %v1222, 0.0
    %vm1228 = vcmp.gt.f32.partialorder %v1223, 0.0
    %v1229 = vmul.f32 %v1219, 0.2
    %v1230 = vmul.f32 %v1220, 0.2
    %v1231 = vmul.f32 %v1221, 0.2
    %v1232 = vmul.f32 %v1222, 0.2
    %v1233 = vmul.f32 %v1223, 0.2
    %v1234 = vsel %vm1224, %v1219, %v1229
    %v1235 = vsel %vm1225, %v1220, %v1230
    %v1236 = vsel %vm1226, %v1221, %v1231
    %v1237 = vsel %vm1227, %v1222, %v1232
    %v1238 = vsel %vm1228, %v1223, %v1233
    %v1239 = vsel %vm764, %v1234, -1e+30
    %v1240 = vsel %vm765, %v1235, -1e+30
    %v1241 = vsel %vm766, %v1236, -1e+30
    %v1242 = vsel %vm767, %v1237, -1e+30
    %v1243 = vsel %vm768, %v1238, -1e+30
    %v1244 = vsel %vm294, %v1239, -inf
    %v1245 = vrot.slane %v1244, 4
    %v1246 = vmax.f32 %v1244, %v1245
    %v1247 = vrot.slane %v1246, 2
    %v1248 = vmax.f32 %v1246, %v1247
    %v1249 = vrot.slane %v1248, 1
    %v1250 = vmax.f32 %v1248, %v1249
    %v1251 = vsel %vm294, %v1240, -inf
    %v1252 = vrot.slane %v1251, 4
    %v1253 = vmax.f32 %v1251, %v1252
    %v1254 = vrot.slane %v1253, 2
    %v1255 = vmax.f32 %v1253, %v1254
    %v1256 = vrot.slane %v1255, 1
    %v1257 = vmax.f32 %v1255, %v1256
    %v1258 = vsel %vm294, %v1241, -inf
    %v1259 = vrot.slane %v1258, 4
    %v1260 = vmax.f32 %v1258, %v1259
    %v1261 = vrot.slane %v1260, 2
    %v1262 = vmax.f32 %v1260, %v1261
    %v1263 = vrot.slane %v1262, 1
    %v1264 = vmax.f32 %v1262, %v1263
    %v1265 = vsel %vm294, %v1242, -inf
    %v1266 = vrot.slane %v1265, 4
    %v1267 = vmax.f32 %v1265, %v1266
    %v1268 = vrot.slane %v1267, 2
    %v1269 = vmax.f32 %v1267, %v1268
    %v1270 = vrot.slane %v1269, 1
    %v1271 = vmax.f32 %v1269, %v1270
    %v1272 = vsel %vm294, %v1243, -inf
    %v1273 = vrot.slane %v1272, 4
    %v1274 = vmax.f32 %v1272, %v1273
    %v1275 = vrot.slane %v1274, 2
    %v1276 = vmax.f32 %v1274, %v1275
    %v1277 = vrot.slane %v1276, 1
    %v1278 = vmax.f32 %v1276, %v1277
    %vm1279 = vcmp.gt.f32.partialorder %v1250, -5e+29
    %vm1280 = vcmp.gt.f32.partialorder %v1257, -5e+29
    %vm1281 = vcmp.gt.f32.partialorder %v1264, -5e+29
    %vm1282 = vcmp.gt.f32.partialorder %v1271, -5e+29
    %vm1283 = vcmp.gt.f32.partialorder %v1278, -5e+29
    %v1284 = vsel %vm1279, %v1250, 0.0
    %v1285 = vsel %vm1280, %v1257, 0.0
    %v1286 = vsel %vm1281, %v1264, 0.0
    %v1287 = vsel %vm1282, %v1271, 0.0
    %v1288 = vsel %vm1283, %v1278, 0.0
    %v1289 = vsub.f32 %v1239, %v1284
    %v1290 = vsub.f32 %v1240, %v1285
    %v1291 = vsub.f32 %v1241, %v1286
    %v1292 = vsub.f32 %v1242, %v1287
    %v1293 = vsub.f32 %v1243, %v1288
    %v1294 = vmul.f32 %v1289, 1.442695
    %v1295 = vpow.pop %v1294
    %v1296 = vmul.f32 %v1290, 1.442695
    %v1297 = vpow.pop %v1296
    %v1298 = vmul.f32 %v1291, 1.442695
    %v1299 = vpow.pop %v1298
    %v1300 = vmul.f32 %v1292, 1.442695
    %v1301 = vpow.pop %v1300
    %v1302 = vmul.f32 %v1293, 1.442695
    %v1303 = vpow.pop %v1302
    %v1304 = vsel %vm294, %v1295, 0.0
    %v1305 = vrot.slane %v1304, 4
    %v1306 = vadd.f32 %v1304, %v1305
    %v1307 = vrot.slane %v1306, 2
    %v1308 = vadd.f32 %v1306, %v1307
    %v1309 = vrot.slane %v1308, 1
    %v1310 = vadd.f32 %v1308, %v1309
    %v1311 = vsel %vm294, %v1297, 0.0
    %v1312 = vrot.slane %v1311, 4
    %v1313 = vadd.f32 %v1311, %v1312
    %v1314 = vrot.slane %v1313, 2
    %v1315 = vadd.f32 %v1313, %v1314
    %v1316 = vrot.slane %v1315, 1
    %v1317 = vadd.f32 %v1315, %v1316
    %v1318 = vsel %vm294, %v1299, 0.0
    %v1319 = vrot.slane %v1318, 4
    %v1320 = vadd.f32 %v1318, %v1319
    %v1321 = vrot.slane %v1320, 2
    %v1322 = vadd.f32 %v1320, %v1321
    %v1323 = vrot.slane %v1322, 1
    %v1324 = vadd.f32 %v1322, %v1323
    %v1325 = vsel %vm294, %v1301, 0.0
    %v1326 = vrot.slane %v1325, 4
    %v1327 = vadd.f32 %v1325, %v1326
    %v1328 = vrot.slane %v1327, 2
    %v1329 = vadd.f32 %v1327, %v1328
    %v1330 = vrot.slane %v1329, 1
    %v1331 = vadd.f32 %v1329, %v1330
    %v1332 = vsel %vm294, %v1303, 0.0
    %v1333 = vrot.slane %v1332, 4
    %v1334 = vadd.f32 %v1332, %v1333
    %v1335 = vrot.slane %v1334, 2
    %v1336 = vadd.f32 %v1334, %v1335
    %v1337 = vrot.slane %v1336, 1
    %v1338 = vadd.f32 %v1336, %v1337
    %v1339 = vmul.f32 %v1295, %v1075
    %v1340 = vmul.f32 %v1297, %v1075
    %v1341 = vmul.f32 %v1299, %v1075
    %v1342 = vmul.f32 %v1301, %v1075
    %v1343 = vmul.f32 %v1303, %v1075
    %v1344 = vsel %vm294, %v1339, 0.0
    %v1345 = vrot.slane %v1344, 4
    %v1346 = vadd.f32 %v1344, %v1345
    %v1347 = vrot.slane %v1346, 2
    %v1348 = vadd.f32 %v1346, %v1347
    %v1349 = vrot.slane %v1348, 1
    %v1350 = vadd.f32 %v1348, %v1349
    %v1351 = vsel %vm294, %v1340, 0.0
    %v1352 = vrot.slane %v1351, 4
    %v1353 = vadd.f32 %v1351, %v1352
    %v1354 = vrot.slane %v1353, 2
    %v1355 = vadd.f32 %v1353, %v1354
    %v1356 = vrot.slane %v1355, 1
    %v1357 = vadd.f32 %v1355, %v1356
    %v1358 = vsel %vm294, %v1341, 0.0
    %v1359 = vrot.slane %v1358, 4
    %v1360 = vadd.f32 %v1358, %v1359
    %v1361 = vrot.slane %v1360, 2
    %v1362 = vadd.f32 %v1360, %v1361
    %v1363 = vrot.slane %v1362, 1
    %v1364 = vadd.f32 %v1362, %v1363
    %v1365 = vsel %vm294, %v1342, 0.0
    %v1366 = vrot.slane %v1365, 4
    %v1367 = vadd.f32 %v1365, %v1366
    %v1368 = vrot.slane %v1367, 2
    %v1369 = vadd.f32 %v1367, %v1368
    %v1370 = vrot.slane %v1369, 1
    %v1371 = vadd.f32 %v1369, %v1370
    %v1372 = vsel %vm294, %v1343, 0.0
    %v1373 = vrot.slane %v1372, 4
    %v1374 = vadd.f32 %v1372, %v1373
    %v1375 = vrot.slane %v1374, 2
    %v1376 = vadd.f32 %v1374, %v1375
    %v1377 = vrot.slane %v1376, 1
    %v1378 = vadd.f32 %v1376, %v1377
    %vm1379 = vcmp.gt.f32.partialorder %v1310, 0.0
    %vm1380 = vcmp.gt.f32.partialorder %v1317, 0.0
    %vm1381 = vcmp.gt.f32.partialorder %v1324, 0.0
    %vm1382 = vcmp.gt.f32.partialorder %v1331, 0.0
    %vm1383 = vcmp.gt.f32.partialorder %v1338, 0.0
    %v1384 = vsel %vm1379, %v1310, 1.0
    %v1385 = vsel %vm1380, %v1317, 1.0
    %v1386 = vsel %vm1381, %v1324, 1.0
    %v1387 = vsel %vm1382, %v1331, 1.0
    %v1388 = vsel %vm1383, %v1338, 1.0
    %v1389 = vrcp.pop %v1384
    %v1390 = vrcp.pop %v1385
    %v1391 = vrcp.pop %v1386
    %v1392 = vrcp.pop %v1387
    %v1393 = vrcp.pop %v1388
    %v1394 = vmul.f32 %v1350, %v1389
    %v1395 = vmul.f32 %v1357, %v1390
    %v1396 = vmul.f32 %v1364, %v1391
    %v1397 = vmul.f32 %v1371, %v1392
    %v1398 = vmul.f32 %v1378, %v1393
    %v1399 = vadd.f32 %v1394, %v993
    %v1400 = vadd.f32 %v1395, %v993
    %v1401 = vadd.f32 %v1396, %v993
    %v1402 = vadd.f32 %v1397, %v993
    %v1403 = vadd.f32 %v1398, %v993
    %v1404 = vmax.f32 %v1399, 0.0
    %v1405 = vmax.f32 %v1400, 0.0
    %v1406 = vmax.f32 %v1401, 0.0
    %v1407 = vmax.f32 %v1402, 0.0
    %v1408 = vmax.f32 %v1403, 0.0
    %v1414 = vrot.slane %v1405, 7
    %v1415 = vsel %vm521, %v1414, %v1404
    %v1416 = vrot.slane %v1406, 6
    %v1417 = vsel %vm524, %v1416, %v1415
    %v1418 = vrot.slane %v1407, 5
    %v1419 = vsel %vm527, %v1418, %v1417
    %v1420 = vrot.slane %v1408, 4
    %v1421 = vsel %vm530, %v1420, %v1419
    %v1423 = vsel %vm294, %v1421, 0.0
    %v1424 = vrot.slane %v1423, 4
    %v1425 = vadd.f32 %v1423, %v1424
    %v1426 = vrot.slane %v1425, 2
    %v1427 = vadd.f32 %v1425, %v1426
    %v1428 = vrot.slane %v1427, 1
    %v1429 = vadd.f32 %v1427, %v1428
    %v1430 = vrcp.pop 5.0
    %v1431 = vmul.f32 %v1429, %v1430
    %v1432 = vld [vmem:[%s5] sm:$0xff]
    %v1433 = vld [vmem:[%s5 + $0x8] sm:$0xff]
    %v1434 = vld [vmem:[%s5 + $0x10] sm:$0xff]
    %v1435 = vld [vmem:[%s5 + $0x18] sm:$0xff]
    %v1436 = vld [vmem:[%s5 + $0x20] sm:$0xff]
    %v1437 = vld [vmem:[%s5 + $0x28] sm:$0xff]
    %v1438 = vld [vmem:[%s5 + $0x30] sm:$0xff]
    %v1439 = vld [vmem:[%s5 + $0x38] sm:$0xff]
    %v1440 = vld [vmem:[%s5 + $0x40] sm:$0xff]
    %v1441 = vld [vmem:[%s5 + $0x48] sm:$0xff]
    %v1442 = vld [vmem:[%s5 + $0x50] sm:$0xff]
    %v1443 = vld [vmem:[%s5 + $0x58] sm:$0xff]
    %v1444 = vld [vmem:[%s5 + $0x60] sm:$0xff]
    %v1445 = vld [vmem:[%s5 + $0x68] sm:$0xff]
    %v1446 = vld [vmem:[%s5 + $0x70] sm:$0xff]
    %v1447 = vld [vmem:[%s5 + $0x78] sm:$0xff]
    %v1448 = vld [vmem:[%s5 + $0x80] sm:$0x1]
    %1449 = vmatprep.subr.mxu0 0.0
    %1450 = vmatpush1.msra.mxu0 %v1432
    %1451 = vmatprep.subr.mxu0 0.0
    %1452 = vmatpush1.msra.mxu0 %v1433
    %1453 = vmatprep.subr.mxu0 0.0
    %1454 = vmatpush1.msra.mxu0 %v1434
    %1455 = vmatprep.subr.mxu0 0.0
    %1456 = vmatpush1.msra.mxu0 %v1435
    %1457 = vmatprep.subr.mxu0 0.0
    %1458 = vmatpush1.msra.mxu0 %v1436
    %1459 = vmatprep.subr.mxu0 0.0
    %1460 = vmatpush1.msra.mxu0 %v1437
    %1461 = vmatprep.subr.mxu0 0.0
    %1462 = vmatpush1.msra.mxu0 %v1438
    %1463 = vmatprep.subr.mxu0 0.0
    %1464 = vmatpush1.msra.mxu0 %v1439
    %1465 = vmatprep.subr.mxu0 0.0
    %1466 = vmatpush1.msra.mxu0 %v1440
    %1467 = vmatprep.subr.mxu0 0.0
    %1468 = vmatpush1.msra.mxu0 %v1441
    %1469 = vmatprep.subr.mxu0 0.0
    %1470 = vmatpush1.msra.mxu0 %v1442
    %1471 = vmatprep.subr.mxu0 0.0
    %1472 = vmatpush1.msra.mxu0 %v1443
    %1473 = vmatprep.subr.mxu0 0.0
    %1474 = vmatpush1.msra.mxu0 %v1444
    %1475 = vmatprep.subr.mxu0 0.0
    %1476 = vmatpush1.msra.mxu0 %v1445
    %1477 = vmatprep.subr.mxu0 0.0
    %1478 = vmatpush1.msra.mxu0 %v1446
    %1479 = vmatprep.subr.mxu0 0.0
    %1480 = vmatpush1.msra.mxu0 %v1447
    %1481 = vmatprep.subr.mxu0 0.0
    %1482 = vmatpush1.msra.mxu0 0.0
    %1483 = vmatprep.subr.mxu0 0.0
    %1484 = vmatpush1.msra.mxu0 0.0
    %1485 = vmatprep.subr.mxu0 0.0
    %1486 = vmatpush1.msra.mxu0 0.0
    %1487 = vmatprep.subr.mxu0 0.0
    %1488 = vmatpush1.msra.mxu0 0.0
    %1489 = vmatprep.subr.mxu0 0.0
    %1490 = vmatpush1.msra.mxu0 0.0
    %1491 = vmatprep.subr.mxu0 0.0
    %1492 = vmatpush1.msra.mxu0 0.0
    %1493 = vmatprep.subr.mxu0 0.0
    %1494 = vmatpush1.msra.mxu0 0.0
    %1495 = vmatprep.subr.mxu0 0.0
    %1496 = vmatpush1.msra.mxu0 0.0
    %1497 = vmatprep.subr.mxu0 0.0
    %1498 = vmatpush1.msra.mxu0 0.0
    %1499 = vmatprep.subr.mxu0 0.0
    %1500 = vmatpush1.msra.mxu0 0.0
    %1501 = vmatprep.subr.mxu0 0.0
    %1502 = vmatpush1.msra.mxu0 0.0
    %1503 = vmatprep.subr.mxu0 0.0
    %1504 = vmatpush1.msra.mxu0 0.0
    %1505 = vmatprep.subr.mxu0 0.0
    %1506 = vmatpush1.msra.mxu0 0.0
    %1507 = vmatprep.subr.mxu0 0.0
    %1508 = vmatpush1.msra.mxu0 0.0
    %1509 = vmatprep.subr.mxu0 0.0
    %1510 = vmatpush1.msra.mxu0 0.0
    %1511 = vmatprep.subr.mxu0 0.0
    %1512 = vmatpush1.msra.mxu0 0.0
    %1513 = vmatprep.mubr.f32.mxu0 0.0
    %1514 = vmatmul.mubr.f32.gmra.mrb[0].mxu0 %v1431
    %v1515 = vpop.f32.mrb[0].mxu0
    %v1516 = vadd.f32 %v1448, %v1515
    %v1517 = vpop.f32.mrb[0].mxu0
    %1518 = vdwg.mxu0
    %v1519 = vmax.f32 %v1516, 0.0
    %v1520 = vld [vmem:[%s6] sm:$0xff]
    %v1521 = vld [vmem:[%s6 + $0x8] sm:$0xff]
    %v1522 = vld [vmem:[%s6 + $0x10] sm:$0xff]
    %v1523 = vld [vmem:[%s6 + $0x18] sm:$0xff]
    %v1524 = vld [vmem:[%s6 + $0x20] sm:$0xff]
    %v1525 = vld [vmem:[%s6 + $0x28] sm:$0xff]
    %v1526 = vld [vmem:[%s6 + $0x30] sm:$0xff]
    %v1527 = vld [vmem:[%s6 + $0x38] sm:$0xff]
    %v1528 = vld [vmem:[%s6 + $0x40] sm:$0x1]
    %vm1529 = vcmask 523264
    %v1531 = vsel %vm1529, %v1519, 0
    %1533 = vmatprep.subr.mxu0 0.0
    %1534 = vmatpush1.msra.mxu0 %v1520
    %1535 = vmatprep.subr.mxu0 0.0
    %1536 = vmatpush1.msra.mxu0 %v1521
    %1537 = vmatprep.subr.mxu0 0.0
    %1538 = vmatpush1.msra.mxu0 %v1522
    %1539 = vmatprep.subr.mxu0 0.0
    %1540 = vmatpush1.msra.mxu0 %v1523
    %1541 = vmatprep.subr.mxu0 0.0
    %1542 = vmatpush1.msra.mxu0 %v1524
    %1543 = vmatprep.subr.mxu0 0.0
    %1544 = vmatpush1.msra.mxu0 %v1525
    %1545 = vmatprep.subr.mxu0 0.0
    %1546 = vmatpush1.msra.mxu0 %v1526
    %1547 = vmatprep.subr.mxu0 0.0
    %1548 = vmatpush1.msra.mxu0 %v1527
    %1549 = vmatprep.subr.mxu0 0.0
    %1550 = vmatpush1.msra.mxu0 0.0
    %1551 = vmatprep.subr.mxu0 0.0
    %1552 = vmatpush1.msra.mxu0 0.0
    %1553 = vmatprep.subr.mxu0 0.0
    %1554 = vmatpush1.msra.mxu0 0.0
    %1555 = vmatprep.subr.mxu0 0.0
    %1556 = vmatpush1.msra.mxu0 0.0
    %1557 = vmatprep.subr.mxu0 0.0
    %1558 = vmatpush1.msra.mxu0 0.0
    %1559 = vmatprep.subr.mxu0 0.0
    %1560 = vmatpush1.msra.mxu0 0.0
    %1561 = vmatprep.subr.mxu0 0.0
    %1562 = vmatpush1.msra.mxu0 0.0
    %1563 = vmatprep.subr.mxu0 0.0
    %1564 = vmatpush1.msra.mxu0 0.0
    %1565 = vmatprep.subr.mxu0 0.0
    %1566 = vmatpush1.msra.mxu0 0.0
    %1567 = vmatprep.subr.mxu0 0.0
    %1568 = vmatpush1.msra.mxu0 0.0
    %1569 = vmatprep.subr.mxu0 0.0
    %1570 = vmatpush1.msra.mxu0 0.0
    %1571 = vmatprep.subr.mxu0 0.0
    %1572 = vmatpush1.msra.mxu0 0.0
    %1573 = vmatprep.subr.mxu0 0.0
    %1574 = vmatpush1.msra.mxu0 0.0
    %1575 = vmatprep.subr.mxu0 0.0
    %1576 = vmatpush1.msra.mxu0 0.0
    %1577 = vmatprep.subr.mxu0 0.0
    %1578 = vmatpush1.msra.mxu0 0.0
    %1579 = vmatprep.subr.mxu0 0.0
    %1580 = vmatpush1.msra.mxu0 0.0
    %1581 = vmatprep.subr.mxu0 0.0
    %1582 = vmatpush1.msra.mxu0 0.0
    %1583 = vmatprep.subr.mxu0 0.0
    %1584 = vmatpush1.msra.mxu0 0.0
    %1585 = vmatprep.subr.mxu0 0.0
    %1586 = vmatpush1.msra.mxu0 0.0
    %1587 = vmatprep.subr.mxu0 0.0
    %1588 = vmatpush1.msra.mxu0 0.0
    %1589 = vmatprep.subr.mxu0 0.0
    %1590 = vmatpush1.msra.mxu0 0.0
    %1591 = vmatprep.subr.mxu0 0.0
    %1592 = vmatpush1.msra.mxu0 0.0
    %1593 = vmatprep.subr.mxu0 0.0
    %1594 = vmatpush1.msra.mxu0 0.0
    %1595 = vmatprep.subr.mxu0 0.0
    %1596 = vmatpush1.msra.mxu0 0.0
    %1597 = vmatprep.mubr.f32.mxu0 0.0
    %1598 = vmatmul.mubr.f32.gmra.mrb[0].mxu0 %v1531
    %v1599 = vpop.f32.mrb[0].mxu0
    %v1600 = vadd.f32 %v1528, %v1599
    %v1601 = vpop.f32.mrb[0].mxu0
    %1602 = vdwg.mxu0
    %vm1603 = vcmask 8192
    %1604 = vst.msk [vmem:[#allocation2] sm:$0x1] %vm1603, %v1600
    // Predicated region
    $region30: #{gat_critic_forward.1} parent=1 // pred_check
      _
    $region31: #{gat_critic_forward.1} parent=1 // pred_check_branch
      %1606 = sbr.rel (0) target = $region33
    $region32: #{gat_critic_forward.1} parent=1 // pred_region
      %s1608 = ssub.s32 16, 16
      %1609 = vsyncadd [#allocation3], %s1608
      %s1611 = sshll.u32 [#allocation2], 4
      %s1612 = int_to_ptr.vmem [resolvable:$true] %s1611
      %1614 = dma.vmem_to_hbm [thread:$0]  %s1612, 16, %s7, [#allocation3]
    $region33: #{gat_critic_forward.1} parent=1 // pred_fallthru
      _
    // Predicated region
    $region34: #{gat_critic_forward.1} parent=1 // pred_check
      _
    $region35: #{gat_critic_forward.1} parent=1 // pred_check_branch
      %1616 = sbr.rel (0) target = $region37
    $region36: #{gat_critic_forward.1} parent=1 // pred_region
      %1617 = dma.done [#allocation3], 16
    $region37: #{gat_critic_forward.1} parent=1 // pred_fallthru
      _
    %1618 = vsyncpa [#allocation3], 1

</llo_original>
